<compile_context>
chip_gen: v5e
topology: v5e:2x2
jax: 0.10.0
libtpu: 0.0.40
codegen_flags: <defaults>
</compile_context>

<pallas_src>
import functools

import jax
import jax.numpy as jnp
from jax.experimental import pallas as pl
from jax.experimental.pallas import tpu as pltpu

D = 3      # features per sample (module default)
L = 2      # number of QLayers
B = 8      # batch size
SUB_BLOCKS = 4          # (8,128) vreg-blocks per grid step -> 4096 samples/step


def _cmul(ar, ai, br, bi):
    """(ar+i*ai) * (br+i*bi)"""
    return ar * br - ai * bi, ar * bi + ai * br


def _cmadd(ar, ai, br, bi, cr, ci, dr, di):
    """a*b + c*d for complex numbers given as (re, im) pairs."""
    x1r, x1i = _cmul(ar, ai, br, bi)
    x2r, x2i = _cmul(cr, ci, dr, di)
    return x1r + x2r, x1i + x2i


def classifier_kernel(wb_ref, x_ref, out_ref, *, num_layers, d_in, sub_blocks):
    """wb_ref:  SMEM (3L*(d_in+1),) transformed weights, bias every (d_in+1)th.
    x_ref:   VMEM (d_in, 8*sub_blocks, 128)  -- batch on (sublane, lane).
    out_ref: VMEM (8, 8*sub_blocks, 128) rows [re00,re01,re10,re11,im00..im11]."""
    stride = d_in + 1

    @pl.loop(0, sub_blocks)              # rolled loop bounds the live vreg set
    def _(j):
        row0 = pl.multiple_of(j * 8, 8)
        # Feature slabs for this 1024-sample block: each (8, 128) full vreg.
        xs = [x_ref[d, pl.ds(row0, 8), :] for d in range(d_in)]

        ones = jnp.ones_like(xs[0])
        zeros = jnp.zeros_like(xs[0])
        # rho = |0><0| for every sample (padded samples sliced away on host).
        r00r, r00i = ones, zeros
        r01r, r01i = zeros, zeros
        r10r, r10i = zeros, zeros
        r11r, r11i = zeros, zeros

        for l in range(num_layers):
            def angle(row):
                base = row * stride
                acc = wb_ref[base] * xs[0]
                for d in range(1, d_in):
                    acc = acc + wb_ref[base + d] * xs[d]
                return acc + wb_ref[base + d_in]        # bias (scalar broadcast)

            # Host pre-transformed rows: 0.5*(a+c), 0.5*(a-c), 0.5*b.
            ang_s = angle(3 * l + 0)
            ang_d = angle(3 * l + 1)
            ang_b = angle(3 * l + 2)
            cs, ss = jnp.cos(ang_s), jnp.sin(ang_s)     # EUP slot, per layer
            cd, sd = jnp.cos(ang_d), jnp.sin(ang_d)
            cb, sb = jnp.cos(ang_b), jnp.sin(ang_b)

            # U = Rz(a) Ry(b) Rz(c)
            u00r, u00i = cs * cb, -ss * cb
            u01r, u01i = -cd * sb, sd * sb
            u10r, u10i = cd * sb, sd * sb
            u11r, u11i = cs * cb, ss * cb

            # M = U @ rho
            m00r, m00i = _cmadd(u00r, u00i, r00r, r00i, u01r, u01i, r10r, r10i)
            m01r, m01i = _cmadd(u00r, u00i, r01r, r01i, u01r, u01i, r11r, r11i)
            m10r, m10i = _cmadd(u10r, u10i, r00r, r00i, u11r, u11i, r10r, r10i)
            m11r, m11i = _cmadd(u10r, u10i, r01r, r01i, u11r, u11i, r11r, r11i)

            # rho' = M @ U^dagger   ((U^dagger)_{jk} = conj(U_{kj}))
            r00r, r00i = _cmadd(m00r, m00i, u00r, -u00i, m01r, m01i, u01r, -u01i)
            r01r, r01i = _cmadd(m00r, m00i, u10r, -u10i, m01r, m01i, u11r, -u11i)
            r10r, r10i = _cmadd(m10r, m10i, u00r, -u00i, m11r, m11i, u01r, -u01i)
            r11r, r11i = _cmadd(m10r, m10i, u10r, -u10i, m11r, m11i, u11r, -u11i)

        # Direct full-vreg stores (no concatenate, unmasked 128-lane vst).
        out_ref[0, pl.ds(row0, 8), :] = r00r
        out_ref[1, pl.ds(row0, 8), :] = r01r
        out_ref[2, pl.ds(row0, 8), :] = r10r
        out_ref[3, pl.ds(row0, 8), :] = r11r
        out_ref[4, pl.ds(row0, 8), :] = r00i
        out_ref[5, pl.ds(row0, 8), :] = r01i
        out_ref[6, pl.ds(row0, 8), :] = r10i
        out_ref[7, pl.ds(row0, 8), :] = r11i


def classifier_forward(x, w_all, b_all, *, sub_blocks=SUB_BLOCKS):
    """ClassifierImproved.forward: x (B, D) -> rho (B, 2, 2) complex64."""
    b_in, d_in = x.shape
    num_layers = w_all.shape[0]
    lanes = 128
    tile_rows = 8 * sub_blocks
    tile_b = tile_rows * lanes                      # samples per grid step
    b_pad = pl.cdiv(b_in, tile_b) * tile_b
    rows_total = b_pad // lanes                     # total sublane rows

    # Fold the trig-argument transform into the weights on the host:
    #   [0.5*(a+c), 0.5*(a-c), 0.5*b] = T @ [a, b, c];  phi = W x + b is linear.
    T = jnp.array([[0.5, 0.0, 0.5],
                   [0.5, 0.0, -0.5],
                   [0.0, 0.5, 0.0]], jnp.float32)
    w_t = jnp.einsum('ij,ljd->lid', T, w_all.astype(jnp.float32))
    w_t = w_t.reshape(3 * num_layers, d_in)
    b_t = jnp.einsum('ij,lj->li', T, b_all.astype(jnp.float32))
    b_t = b_t.reshape(3 * num_layers, 1)
    wb = jnp.concatenate([w_t, b_t], axis=1).reshape(-1)   # (3L*(d_in+1),) -> 1-D SMEM

    # Batch packed onto (sublane, lane): sample b -> (row b//128, lane b%128).
    xT = jnp.pad(x.astype(jnp.float32).T, ((0, 0), (0, b_pad - b_in)))
    xT = xT.reshape(d_in, rows_total, lanes)

    kernel = functools.partial(classifier_kernel, num_layers=num_layers,
                               d_in=d_in, sub_blocks=sub_blocks)
    out = pl.pallas_call(
        kernel,
        out_shape=jax.ShapeDtypeStruct((8, rows_total, lanes), jnp.float32),
        grid=(rows_total // tile_rows,),
        in_specs=[
            pl.BlockSpec(memory_space=pltpu.MemorySpace.SMEM),          # weights
            pl.BlockSpec((d_in, tile_rows, lanes), lambda i: (0, i, 0)),  # x tile
        ],
        out_specs=pl.BlockSpec((8, tile_rows, lanes), lambda i: (0, i, 0)),
        compiler_params=pltpu.CompilerParams(
            dimension_semantics=("parallel",)),
    )(wb, xT)

    flat = out.reshape(8, b_pad)[:, :b_in]           # (8, B)
    re = flat[0:4, :]
    im = flat[4:8, :]
    rho = (re + 1j * im).T.astype(jnp.complex64)     # (B, 4)
    return rho.reshape(b_in, 2, 2)


def ref_forward(x, w_all, b_all):
    """Pure-JAX complex reference of the same forward pass."""
    b_in = x.shape[0]
    rho = jnp.zeros((b_in, 2, 2), jnp.complex64).at[:, 0, 0].set(1.0)
    for l in range(w_all.shape[0]):
        phi = x @ w_all[l].T + b_all[l]
        a, b, c = phi[:, 0], phi[:, 1], phi[:, 2]
        cb, sb = jnp.cos(b / 2), jnp.sin(b / 2)
        e_ms = jnp.exp(-0.5j * (a + c))
        e_md = jnp.exp(-0.5j * (a - c))
        u00 = e_ms * cb
        u01 = -e_md * sb
        u10 = jnp.conj(e_md) * sb
        u11 = jnp.conj(e_ms) * cb
        U = jnp.stack(
            [jnp.stack([u00, u01], -1), jnp.stack([u10, u11], -1)], -2
        )  # (B, 2, 2)
        Udag = jnp.conj(jnp.swapaxes(U, -1, -2))
        rho = jnp.einsum("bij,bjk,bkl->bil", U, rho, Udag)
    return rho


if __name__ == "__main__":
    key = jax.random.PRNGKey(0)
    kx, kw, kb = jax.random.split(key, 3)
    x = jax.random.normal(kx, (B, D), jnp.float32)
    w_all = 0.5 * jax.random.normal(kw, (L, 3, D), jnp.float32)   # QLayer weights
    b_all = 0.5 * jax.random.normal(kb, (L, 3), jnp.float32)      # QLayer biases

    fwd = jax.jit(classifier_forward)
    rho = fwd(x, w_all, b_all)
    jax.block_until_ready(rho)

    rho_ref = ref_forward(x, w_all, b_all)
    err = float(jnp.max(jnp.abs(rho - rho_ref)))
    trace_err = float(jnp.max(jnp.abs(jnp.trace(rho, axis1=1, axis2=2) - 1.0)))
    if err > 5e-3 or trace_err > 5e-3:
        raise RuntimeError(f"mismatch: max|d|={err}, trace_err={trace_err}")

    print("KERNEL_OK")
</pallas_src>

<mosaic_0001>
module attributes {stable_mosaic.version = 11 : i64} {
  func.func @classifier_kernel(%arg0: i32, %arg1: memref<24xf32, #tpu.memory_space<smem>>, %arg2: memref<3x32x128xf32, #tpu.memory_space<vmem>>, %arg3: memref<8x32x128xf32, #tpu.memory_space<vmem>>) attributes {dimension_semantics = [#tpu.dimension_semantics<parallel>], iteration_bounds = array<i64: 1>, scalar_prefetch = 0 : i64, scratch_operands = 0 : i64, tpu.core_type = #tpu.core_type<tc>, window_params = [{transform_indices = @transform_0, window_bounds = array<i64: 24>}, {transform_indices = @transform_1, window_bounds = array<i64: 3, 32, 128>}, {transform_indices = @transform_2, window_bounds = array<i64: 8, 32, 128>}]} {
    %c0_i32 = arith.constant 0 : i32
    %c4_i32 = arith.constant 4 : i32
    %0 = arith.addi %c0_i32, %c4_i32 : i32
    %c1_i32 = arith.constant 1 : i32
    scf.for %arg4 = %c0_i32 to %0 step %c1_i32  : i32 {
      %c1_i32_1 = arith.constant 1 : i32
      %1 = arith.muli %arg4, %c1_i32_1 : i32
      %c0_i32_2 = arith.constant 0 : i32
      %2 = arith.addi %c0_i32_2, %1 : i32
      %c8_i32 = arith.constant 8 : i32
      %3 = arith.muli %2, %c8_i32 : i32
      %4 = tpu.assume_multiple %3, 8 : i32
      %c0 = arith.constant 0 : index
      %5 = arith.index_cast %4 : i32 to index
      %c0_3 = arith.constant 0 : index
      %6 = vector.load %arg2[%c0, %5, %c0_3] : memref<3x32x128xf32, #tpu.memory_space<vmem>>, vector<1x8x128xf32>
      %7 = vector.shape_cast %6 : vector<1x8x128xf32> to vector<8x128xf32>
      %c1 = arith.constant 1 : index
      %8 = arith.index_cast %4 : i32 to index
      %c0_4 = arith.constant 0 : index
      %9 = vector.load %arg2[%c1, %8, %c0_4] : memref<3x32x128xf32, #tpu.memory_space<vmem>>, vector<1x8x128xf32>
      %10 = vector.shape_cast %9 : vector<1x8x128xf32> to vector<8x128xf32>
      %c2 = arith.constant 2 : index
      %11 = arith.index_cast %4 : i32 to index
      %c0_5 = arith.constant 0 : index
      %12 = vector.load %arg2[%c2, %11, %c0_5] : memref<3x32x128xf32, #tpu.memory_space<vmem>>, vector<1x8x128xf32>
      %13 = vector.shape_cast %12 : vector<1x8x128xf32> to vector<8x128xf32>
      %cst = arith.constant 1.000000e+00 : f32
      %14 = vector.broadcast %cst : f32 to vector<8x128xf32>
      %cst_6 = arith.constant 0.000000e+00 : f32
      %15 = vector.broadcast %cst_6 : f32 to vector<8x128xf32>
      %c0_7 = arith.constant 0 : index
      %16 = memref.load %arg1[%c0_7] : memref<24xf32, #tpu.memory_space<smem>>
      %17 = vector.broadcast %16 : f32 to vector<8x128xf32>
      %18 = arith.mulf %17, %7 : vector<8x128xf32>
      %c1_8 = arith.constant 1 : index
      %19 = memref.load %arg1[%c1_8] : memref<24xf32, #tpu.memory_space<smem>>
      %20 = vector.broadcast %19 : f32 to vector<8x128xf32>
      %21 = arith.mulf %20, %10 : vector<8x128xf32>
      %22 = arith.addf %18, %21 : vector<8x128xf32>
      %c2_9 = arith.constant 2 : index
      %23 = memref.load %arg1[%c2_9] : memref<24xf32, #tpu.memory_space<smem>>
      %24 = vector.broadcast %23 : f32 to vector<8x128xf32>
      %25 = arith.mulf %24, %13 : vector<8x128xf32>
      %26 = arith.addf %22, %25 : vector<8x128xf32>
      %c3 = arith.constant 3 : index
      %27 = memref.load %arg1[%c3] : memref<24xf32, #tpu.memory_space<smem>>
      %28 = vector.broadcast %27 : f32 to vector<8x128xf32>
      %29 = arith.addf %26, %28 : vector<8x128xf32>
      %c4 = arith.constant 4 : index
      %30 = memref.load %arg1[%c4] : memref<24xf32, #tpu.memory_space<smem>>
      %31 = vector.broadcast %30 : f32 to vector<8x128xf32>
      %32 = arith.mulf %31, %7 : vector<8x128xf32>
      %c5 = arith.constant 5 : index
      %33 = memref.load %arg1[%c5] : memref<24xf32, #tpu.memory_space<smem>>
      %34 = vector.broadcast %33 : f32 to vector<8x128xf32>
      %35 = arith.mulf %34, %10 : vector<8x128xf32>
      %36 = arith.addf %32, %35 : vector<8x128xf32>
      %c6 = arith.constant 6 : index
      %37 = memref.load %arg1[%c6] : memref<24xf32, #tpu.memory_space<smem>>
      %38 = vector.broadcast %37 : f32 to vector<8x128xf32>
      %39 = arith.mulf %38, %13 : vector<8x128xf32>
      %40 = arith.addf %36, %39 : vector<8x128xf32>
      %c7 = arith.constant 7 : index
      %41 = memref.load %arg1[%c7] : memref<24xf32, #tpu.memory_space<smem>>
      %42 = vector.broadcast %41 : f32 to vector<8x128xf32>
      %43 = arith.addf %40, %42 : vector<8x128xf32>
      %c8 = arith.constant 8 : index
      %44 = memref.load %arg1[%c8] : memref<24xf32, #tpu.memory_space<smem>>
      %45 = vector.broadcast %44 : f32 to vector<8x128xf32>
      %46 = arith.mulf %45, %7 : vector<8x128xf32>
      %c9 = arith.constant 9 : index
      %47 = memref.load %arg1[%c9] : memref<24xf32, #tpu.memory_space<smem>>
      %48 = vector.broadcast %47 : f32 to vector<8x128xf32>
      %49 = arith.mulf %48, %10 : vector<8x128xf32>
      %50 = arith.addf %46, %49 : vector<8x128xf32>
      %c10 = arith.constant 10 : index
      %51 = memref.load %arg1[%c10] : memref<24xf32, #tpu.memory_space<smem>>
      %52 = vector.broadcast %51 : f32 to vector<8x128xf32>
      %53 = arith.mulf %52, %13 : vector<8x128xf32>
      %54 = arith.addf %50, %53 : vector<8x128xf32>
      %c11 = arith.constant 11 : index
      %55 = memref.load %arg1[%c11] : memref<24xf32, #tpu.memory_space<smem>>
      %56 = vector.broadcast %55 : f32 to vector<8x128xf32>
      %57 = arith.addf %54, %56 : vector<8x128xf32>
      %58 = math.cos %29 : vector<8x128xf32>
      %59 = math.sin %29 : vector<8x128xf32>
      %60 = math.cos %43 : vector<8x128xf32>
      %61 = math.sin %43 : vector<8x128xf32>
      %62 = math.cos %57 : vector<8x128xf32>
      %63 = math.sin %57 : vector<8x128xf32>
      %64 = arith.mulf %58, %62 : vector<8x128xf32>
      %cst_10 = arith.constant 0.000000e+00 : f32
      %65 = vector.broadcast %cst_10 : f32 to vector<8x128xf32>
      %66 = arith.subf %65, %59 : vector<8x128xf32>
      %67 = arith.mulf %66, %62 : vector<8x128xf32>
      %cst_11 = arith.constant 0.000000e+00 : f32
      %68 = vector.broadcast %cst_11 : f32 to vector<8x128xf32>
      %69 = arith.subf %68, %60 : vector<8x128xf32>
      %70 = arith.mulf %69, %63 : vector<8x128xf32>
      %71 = arith.mulf %61, %63 : vector<8x128xf32>
      %72 = arith.mulf %60, %63 : vector<8x128xf32>
      %73 = arith.mulf %61, %63 : vector<8x128xf32>
      %74 = arith.mulf %58, %62 : vector<8x128xf32>
      %75 = arith.mulf %59, %62 : vector<8x128xf32>
      %76 = arith.mulf %64, %14 : vector<8x128xf32>
      %77 = arith.mulf %67, %15 : vector<8x128xf32>
      %78 = arith.subf %76, %77 : vector<8x128xf32>
      %79 = arith.mulf %64, %15 : vector<8x128xf32>
      %80 = arith.mulf %67, %14 : vector<8x128xf32>
      %81 = arith.addf %79, %80 : vector<8x128xf32>
      %82 = arith.mulf %70, %15 : vector<8x128xf32>
      %83 = arith.mulf %71, %15 : vector<8x128xf32>
      %84 = arith.subf %82, %83 : vector<8x128xf32>
      %85 = arith.mulf %70, %15 : vector<8x128xf32>
      %86 = arith.mulf %71, %15 : vector<8x128xf32>
      %87 = arith.addf %85, %86 : vector<8x128xf32>
      %88 = arith.addf %78, %84 : vector<8x128xf32>
      %89 = arith.addf %81, %87 : vector<8x128xf32>
      %90 = arith.mulf %64, %15 : vector<8x128xf32>
      %91 = arith.mulf %67, %15 : vector<8x128xf32>
      %92 = arith.subf %90, %91 : vector<8x128xf32>
      %93 = arith.mulf %64, %15 : vector<8x128xf32>
      %94 = arith.mulf %67, %15 : vector<8x128xf32>
      %95 = arith.addf %93, %94 : vector<8x128xf32>
      %96 = arith.mulf %70, %15 : vector<8x128xf32>
      %97 = arith.mulf %71, %15 : vector<8x128xf32>
      %98 = arith.subf %96, %97 : vector<8x128xf32>
      %99 = arith.mulf %70, %15 : vector<8x128xf32>
      %100 = arith.mulf %71, %15 : vector<8x128xf32>
      %101 = arith.addf %99, %100 : vector<8x128xf32>
      %102 = arith.addf %92, %98 : vector<8x128xf32>
      %103 = arith.addf %95, %101 : vector<8x128xf32>
      %104 = arith.mulf %72, %14 : vector<8x128xf32>
      %105 = arith.mulf %73, %15 : vector<8x128xf32>
      %106 = arith.subf %104, %105 : vector<8x128xf32>
      %107 = arith.mulf %72, %15 : vector<8x128xf32>
      %108 = arith.mulf %73, %14 : vector<8x128xf32>
      %109 = arith.addf %107, %108 : vector<8x128xf32>
      %110 = arith.mulf %74, %15 : vector<8x128xf32>
      %111 = arith.mulf %75, %15 : vector<8x128xf32>
      %112 = arith.subf %110, %111 : vector<8x128xf32>
      %113 = arith.mulf %74, %15 : vector<8x128xf32>
      %114 = arith.mulf %75, %15 : vector<8x128xf32>
      %115 = arith.addf %113, %114 : vector<8x128xf32>
      %116 = arith.addf %106, %112 : vector<8x128xf32>
      %117 = arith.addf %109, %115 : vector<8x128xf32>
      %118 = arith.mulf %72, %15 : vector<8x128xf32>
      %119 = arith.mulf %73, %15 : vector<8x128xf32>
      %120 = arith.subf %118, %119 : vector<8x128xf32>
      %121 = arith.mulf %72, %15 : vector<8x128xf32>
      %122 = arith.mulf %73, %15 : vector<8x128xf32>
      %123 = arith.addf %121, %122 : vector<8x128xf32>
      %124 = arith.mulf %74, %15 : vector<8x128xf32>
      %125 = arith.mulf %75, %15 : vector<8x128xf32>
      %126 = arith.subf %124, %125 : vector<8x128xf32>
      %127 = arith.mulf %74, %15 : vector<8x128xf32>
      %128 = arith.mulf %75, %15 : vector<8x128xf32>
      %129 = arith.addf %127, %128 : vector<8x128xf32>
      %130 = arith.addf %120, %126 : vector<8x128xf32>
      %131 = arith.addf %123, %129 : vector<8x128xf32>
      %cst_12 = arith.constant 0.000000e+00 : f32
      %132 = vector.broadcast %cst_12 : f32 to vector<8x128xf32>
      %133 = arith.subf %132, %67 : vector<8x128xf32>
      %cst_13 = arith.constant 0.000000e+00 : f32
      %134 = vector.broadcast %cst_13 : f32 to vector<8x128xf32>
      %135 = arith.subf %134, %71 : vector<8x128xf32>
      %136 = arith.mulf %88, %64 : vector<8x128xf32>
      %137 = arith.mulf %89, %133 : vector<8x128xf32>
      %138 = arith.subf %136, %137 : vector<8x128xf32>
      %139 = arith.mulf %88, %133 : vector<8x128xf32>
      %140 = arith.mulf %89, %64 : vector<8x128xf32>
      %141 = arith.addf %139, %140 : vector<8x128xf32>
      %142 = arith.mulf %102, %70 : vector<8x128xf32>
      %143 = arith.mulf %103, %135 : vector<8x128xf32>
      %144 = arith.subf %142, %143 : vector<8x128xf32>
      %145 = arith.mulf %102, %135 : vector<8x128xf32>
      %146 = arith.mulf %103, %70 : vector<8x128xf32>
      %147 = arith.addf %145, %146 : vector<8x128xf32>
      %148 = arith.addf %138, %144 : vector<8x128xf32>
      %149 = arith.addf %141, %147 : vector<8x128xf32>
      %cst_14 = arith.constant 0.000000e+00 : f32
      %150 = vector.broadcast %cst_14 : f32 to vector<8x128xf32>
      %151 = arith.subf %150, %73 : vector<8x128xf32>
      %cst_15 = arith.constant 0.000000e+00 : f32
      %152 = vector.broadcast %cst_15 : f32 to vector<8x128xf32>
      %153 = arith.subf %152, %75 : vector<8x128xf32>
      %154 = arith.mulf %88, %72 : vector<8x128xf32>
      %155 = arith.mulf %89, %151 : vector<8x128xf32>
      %156 = arith.subf %154, %155 : vector<8x128xf32>
      %157 = arith.mulf %88, %151 : vector<8x128xf32>
      %158 = arith.mulf %89, %72 : vector<8x128xf32>
      %159 = arith.addf %157, %158 : vector<8x128xf32>
      %160 = arith.mulf %102, %74 : vector<8x128xf32>
      %161 = arith.mulf %103, %153 : vector<8x128xf32>
      %162 = arith.subf %160, %161 : vector<8x128xf32>
      %163 = arith.mulf %102, %153 : vector<8x128xf32>
      %164 = arith.mulf %103, %74 : vector<8x128xf32>
      %165 = arith.addf %163, %164 : vector<8x128xf32>
      %166 = arith.addf %156, %162 : vector<8x128xf32>
      %167 = arith.addf %159, %165 : vector<8x128xf32>
      %cst_16 = arith.constant 0.000000e+00 : f32
      %168 = vector.broadcast %cst_16 : f32 to vector<8x128xf32>
      %169 = arith.subf %168, %67 : vector<8x128xf32>
      %cst_17 = arith.constant 0.000000e+00 : f32
      %170 = vector.broadcast %cst_17 : f32 to vector<8x128xf32>
      %171 = arith.subf %170, %71 : vector<8x128xf32>
      %172 = arith.mulf %116, %64 : vector<8x128xf32>
      %173 = arith.mulf %117, %169 : vector<8x128xf32>
      %174 = arith.subf %172, %173 : vector<8x128xf32>
      %175 = arith.mulf %116, %169 : vector<8x128xf32>
      %176 = arith.mulf %117, %64 : vector<8x128xf32>
      %177 = arith.addf %175, %176 : vector<8x128xf32>
      %178 = arith.mulf %130, %70 : vector<8x128xf32>
      %179 = arith.mulf %131, %171 : vector<8x128xf32>
      %180 = arith.subf %178, %179 : vector<8x128xf32>
      %181 = arith.mulf %130, %171 : vector<8x128xf32>
      %182 = arith.mulf %131, %70 : vector<8x128xf32>
      %183 = arith.addf %181, %182 : vector<8x128xf32>
      %184 = arith.addf %174, %180 : vector<8x128xf32>
      %185 = arith.addf %177, %183 : vector<8x128xf32>
      %cst_18 = arith.constant 0.000000e+00 : f32
      %186 = vector.broadcast %cst_18 : f32 to vector<8x128xf32>
      %187 = arith.subf %186, %73 : vector<8x128xf32>
      %cst_19 = arith.constant 0.000000e+00 : f32
      %188 = vector.broadcast %cst_19 : f32 to vector<8x128xf32>
      %189 = arith.subf %188, %75 : vector<8x128xf32>
      %190 = arith.mulf %116, %72 : vector<8x128xf32>
      %191 = arith.mulf %117, %187 : vector<8x128xf32>
      %192 = arith.subf %190, %191 : vector<8x128xf32>
      %193 = arith.mulf %116, %187 : vector<8x128xf32>
      %194 = arith.mulf %117, %72 : vector<8x128xf32>
      %195 = arith.addf %193, %194 : vector<8x128xf32>
      %196 = arith.mulf %130, %74 : vector<8x128xf32>
      %197 = arith.mulf %131, %189 : vector<8x128xf32>
      %198 = arith.subf %196, %197 : vector<8x128xf32>
      %199 = arith.mulf %130, %189 : vector<8x128xf32>
      %200 = arith.mulf %131, %74 : vector<8x128xf32>
      %201 = arith.addf %199, %200 : vector<8x128xf32>
      %202 = arith.addf %192, %198 : vector<8x128xf32>
      %203 = arith.addf %195, %201 : vector<8x128xf32>
      %c12 = arith.constant 12 : index
      %204 = memref.load %arg1[%c12] : memref<24xf32, #tpu.memory_space<smem>>
      %205 = vector.broadcast %204 : f32 to vector<8x128xf32>
      %206 = arith.mulf %205, %7 : vector<8x128xf32>
      %c13 = arith.constant 13 : index
      %207 = memref.load %arg1[%c13] : memref<24xf32, #tpu.memory_space<smem>>
      %208 = vector.broadcast %207 : f32 to vector<8x128xf32>
      %209 = arith.mulf %208, %10 : vector<8x128xf32>
      %210 = arith.addf %206, %209 : vector<8x128xf32>
      %c14 = arith.constant 14 : index
      %211 = memref.load %arg1[%c14] : memref<24xf32, #tpu.memory_space<smem>>
      %212 = vector.broadcast %211 : f32 to vector<8x128xf32>
      %213 = arith.mulf %212, %13 : vector<8x128xf32>
      %214 = arith.addf %210, %213 : vector<8x128xf32>
      %c15 = arith.constant 15 : index
      %215 = memref.load %arg1[%c15] : memref<24xf32, #tpu.memory_space<smem>>
      %216 = vector.broadcast %215 : f32 to vector<8x128xf32>
      %217 = arith.addf %214, %216 : vector<8x128xf32>
      %c16 = arith.constant 16 : index
      %218 = memref.load %arg1[%c16] : memref<24xf32, #tpu.memory_space<smem>>
      %219 = vector.broadcast %218 : f32 to vector<8x128xf32>
      %220 = arith.mulf %219, %7 : vector<8x128xf32>
      %c17 = arith.constant 17 : index
      %221 = memref.load %arg1[%c17] : memref<24xf32, #tpu.memory_space<smem>>
      %222 = vector.broadcast %221 : f32 to vector<8x128xf32>
      %223 = arith.mulf %222, %10 : vector<8x128xf32>
      %224 = arith.addf %220, %223 : vector<8x128xf32>
      %c18 = arith.constant 18 : index
      %225 = memref.load %arg1[%c18] : memref<24xf32, #tpu.memory_space<smem>>
      %226 = vector.broadcast %225 : f32 to vector<8x128xf32>
      %227 = arith.mulf %226, %13 : vector<8x128xf32>
      %228 = arith.addf %224, %227 : vector<8x128xf32>
      %c19 = arith.constant 19 : index
      %229 = memref.load %arg1[%c19] : memref<24xf32, #tpu.memory_space<smem>>
      %230 = vector.broadcast %229 : f32 to vector<8x128xf32>
      %231 = arith.addf %228, %230 : vector<8x128xf32>
      %c20 = arith.constant 20 : index
      %232 = memref.load %arg1[%c20] : memref<24xf32, #tpu.memory_space<smem>>
      %233 = vector.broadcast %232 : f32 to vector<8x128xf32>
      %234 = arith.mulf %233, %7 : vector<8x128xf32>
      %c21 = arith.constant 21 : index
      %235 = memref.load %arg1[%c21] : memref<24xf32, #tpu.memory_space<smem>>
      %236 = vector.broadcast %235 : f32 to vector<8x128xf32>
      %237 = arith.mulf %236, %10 : vector<8x128xf32>
      %238 = arith.addf %234, %237 : vector<8x128xf32>
      %c22 = arith.constant 22 : index
      %239 = memref.load %arg1[%c22] : memref<24xf32, #tpu.memory_space<smem>>
      %240 = vector.broadcast %239 : f32 to vector<8x128xf32>
      %241 = arith.mulf %240, %13 : vector<8x128xf32>
      %242 = arith.addf %238, %241 : vector<8x128xf32>
      %c23 = arith.constant 23 : index
      %243 = memref.load %arg1[%c23] : memref<24xf32, #tpu.memory_space<smem>>
      %244 = vector.broadcast %243 : f32 to vector<8x128xf32>
      %245 = arith.addf %242, %244 : vector<8x128xf32>
      %246 = math.cos %217 : vector<8x128xf32>
      %247 = math.sin %217 : vector<8x128xf32>
      %248 = math.cos %231 : vector<8x128xf32>
      %249 = math.sin %231 : vector<8x128xf32>
      %250 = math.cos %245 : vector<8x128xf32>
      %251 = math.sin %245 : vector<8x128xf32>
      %252 = arith.mulf %246, %250 : vector<8x128xf32>
      %cst_20 = arith.constant 0.000000e+00 : f32
      %253 = vector.broadcast %cst_20 : f32 to vector<8x128xf32>
      %254 = arith.subf %253, %247 : vector<8x128xf32>
      %255 = arith.mulf %254, %250 : vector<8x128xf32>
      %cst_21 = arith.constant 0.000000e+00 : f32
      %256 = vector.broadcast %cst_21 : f32 to vector<8x128xf32>
      %257 = arith.subf %256, %248 : vector<8x128xf32>
      %258 = arith.mulf %257, %251 : vector<8x128xf32>
      %259 = arith.mulf %249, %251 : vector<8x128xf32>
      %260 = arith.mulf %248, %251 : vector<8x128xf32>
      %261 = arith.mulf %249, %251 : vector<8x128xf32>
      %262 = arith.mulf %246, %250 : vector<8x128xf32>
      %263 = arith.mulf %247, %250 : vector<8x128xf32>
      %264 = arith.mulf %252, %148 : vector<8x128xf32>
      %265 = arith.mulf %255, %149 : vector<8x128xf32>
      %266 = arith.subf %264, %265 : vector<8x128xf32>
      %267 = arith.mulf %252, %149 : vector<8x128xf32>
      %268 = arith.mulf %255, %148 : vector<8x128xf32>
      %269 = arith.addf %267, %268 : vector<8x128xf32>
      %270 = arith.mulf %258, %184 : vector<8x128xf32>
      %271 = arith.mulf %259, %185 : vector<8x128xf32>
      %272 = arith.subf %270, %271 : vector<8x128xf32>
      %273 = arith.mulf %258, %185 : vector<8x128xf32>
      %274 = arith.mulf %259, %184 : vector<8x128xf32>
      %275 = arith.addf %273, %274 : vector<8x128xf32>
      %276 = arith.addf %266, %272 : vector<8x128xf32>
      %277 = arith.addf %269, %275 : vector<8x128xf32>
      %278 = arith.mulf %252, %166 : vector<8x128xf32>
      %279 = arith.mulf %255, %167 : vector<8x128xf32>
      %280 = arith.subf %278, %279 : vector<8x128xf32>
      %281 = arith.mulf %252, %167 : vector<8x128xf32>
      %282 = arith.mulf %255, %166 : vector<8x128xf32>
      %283 = arith.addf %281, %282 : vector<8x128xf32>
      %284 = arith.mulf %258, %202 : vector<8x128xf32>
      %285 = arith.mulf %259, %203 : vector<8x128xf32>
      %286 = arith.subf %284, %285 : vector<8x128xf32>
      %287 = arith.mulf %258, %203 : vector<8x128xf32>
      %288 = arith.mulf %259, %202 : vector<8x128xf32>
      %289 = arith.addf %287, %288 : vector<8x128xf32>
      %290 = arith.addf %280, %286 : vector<8x128xf32>
      %291 = arith.addf %283, %289 : vector<8x128xf32>
      %292 = arith.mulf %260, %148 : vector<8x128xf32>
      %293 = arith.mulf %261, %149 : vector<8x128xf32>
      %294 = arith.subf %292, %293 : vector<8x128xf32>
      %295 = arith.mulf %260, %149 : vector<8x128xf32>
      %296 = arith.mulf %261, %148 : vector<8x128xf32>
      %297 = arith.addf %295, %296 : vector<8x128xf32>
      %298 = arith.mulf %262, %184 : vector<8x128xf32>
      %299 = arith.mulf %263, %185 : vector<8x128xf32>
      %300 = arith.subf %298, %299 : vector<8x128xf32>
      %301 = arith.mulf %262, %185 : vector<8x128xf32>
      %302 = arith.mulf %263, %184 : vector<8x128xf32>
      %303 = arith.addf %301, %302 : vector<8x128xf32>
      %304 = arith.addf %294, %300 : vector<8x128xf32>
      %305 = arith.addf %297, %303 : vector<8x128xf32>
      %306 = arith.mulf %260, %166 : vector<8x128xf32>
      %307 = arith.mulf %261, %167 : vector<8x128xf32>
      %308 = arith.subf %306, %307 : vector<8x128xf32>
      %309 = arith.mulf %260, %167 : vector<8x128xf32>
      %310 = arith.mulf %261, %166 : vector<8x128xf32>
      %311 = arith.addf %309, %310 : vector<8x128xf32>
      %312 = arith.mulf %262, %202 : vector<8x128xf32>
      %313 = arith.mulf %263, %203 : vector<8x128xf32>
      %314 = arith.subf %312, %313 : vector<8x128xf32>
      %315 = arith.mulf %262, %203 : vector<8x128xf32>
      %316 = arith.mulf %263, %202 : vector<8x128xf32>
      %317 = arith.addf %315, %316 : vector<8x128xf32>
      %318 = arith.addf %308, %314 : vector<8x128xf32>
      %319 = arith.addf %311, %317 : vector<8x128xf32>
      %cst_22 = arith.constant 0.000000e+00 : f32
      %320 = vector.broadcast %cst_22 : f32 to vector<8x128xf32>
      %321 = arith.subf %320, %255 : vector<8x128xf32>
      %cst_23 = arith.constant 0.000000e+00 : f32
      %322 = vector.broadcast %cst_23 : f32 to vector<8x128xf32>
      %323 = arith.subf %322, %259 : vector<8x128xf32>
      %324 = arith.mulf %276, %252 : vector<8x128xf32>
      %325 = arith.mulf %277, %321 : vector<8x128xf32>
      %326 = arith.subf %324, %325 : vector<8x128xf32>
      %327 = arith.mulf %276, %321 : vector<8x128xf32>
      %328 = arith.mulf %277, %252 : vector<8x128xf32>
      %329 = arith.addf %327, %328 : vector<8x128xf32>
      %330 = arith.mulf %290, %258 : vector<8x128xf32>
      %331 = arith.mulf %291, %323 : vector<8x128xf32>
      %332 = arith.subf %330, %331 : vector<8x128xf32>
      %333 = arith.mulf %290, %323 : vector<8x128xf32>
      %334 = arith.mulf %291, %258 : vector<8x128xf32>
      %335 = arith.addf %333, %334 : vector<8x128xf32>
      %336 = arith.addf %326, %332 : vector<8x128xf32>
      %337 = arith.addf %329, %335 : vector<8x128xf32>
      %cst_24 = arith.constant 0.000000e+00 : f32
      %338 = vector.broadcast %cst_24 : f32 to vector<8x128xf32>
      %339 = arith.subf %338, %261 : vector<8x128xf32>
      %cst_25 = arith.constant 0.000000e+00 : f32
      %340 = vector.broadcast %cst_25 : f32 to vector<8x128xf32>
      %341 = arith.subf %340, %263 : vector<8x128xf32>
      %342 = arith.mulf %276, %260 : vector<8x128xf32>
      %343 = arith.mulf %277, %339 : vector<8x128xf32>
      %344 = arith.subf %342, %343 : vector<8x128xf32>
      %345 = arith.mulf %276, %339 : vector<8x128xf32>
      %346 = arith.mulf %277, %260 : vector<8x128xf32>
      %347 = arith.addf %345, %346 : vector<8x128xf32>
      %348 = arith.mulf %290, %262 : vector<8x128xf32>
      %349 = arith.mulf %291, %341 : vector<8x128xf32>
      %350 = arith.subf %348, %349 : vector<8x128xf32>
      %351 = arith.mulf %290, %341 : vector<8x128xf32>
      %352 = arith.mulf %291, %262 : vector<8x128xf32>
      %353 = arith.addf %351, %352 : vector<8x128xf32>
      %354 = arith.addf %344, %350 : vector<8x128xf32>
      %355 = arith.addf %347, %353 : vector<8x128xf32>
      %cst_26 = arith.constant 0.000000e+00 : f32
      %356 = vector.broadcast %cst_26 : f32 to vector<8x128xf32>
      %357 = arith.subf %356, %255 : vector<8x128xf32>
      %cst_27 = arith.constant 0.000000e+00 : f32
      %358 = vector.broadcast %cst_27 : f32 to vector<8x128xf32>
      %359 = arith.subf %358, %259 : vector<8x128xf32>
      %360 = arith.mulf %304, %252 : vector<8x128xf32>
      %361 = arith.mulf %305, %357 : vector<8x128xf32>
      %362 = arith.subf %360, %361 : vector<8x128xf32>
      %363 = arith.mulf %304, %357 : vector<8x128xf32>
      %364 = arith.mulf %305, %252 : vector<8x128xf32>
      %365 = arith.addf %363, %364 : vector<8x128xf32>
      %366 = arith.mulf %318, %258 : vector<8x128xf32>
      %367 = arith.mulf %319, %359 : vector<8x128xf32>
      %368 = arith.subf %366, %367 : vector<8x128xf32>
      %369 = arith.mulf %318, %359 : vector<8x128xf32>
      %370 = arith.mulf %319, %258 : vector<8x128xf32>
      %371 = arith.addf %369, %370 : vector<8x128xf32>
      %372 = arith.addf %362, %368 : vector<8x128xf32>
      %373 = arith.addf %365, %371 : vector<8x128xf32>
      %cst_28 = arith.constant 0.000000e+00 : f32
      %374 = vector.broadcast %cst_28 : f32 to vector<8x128xf32>
      %375 = arith.subf %374, %261 : vector<8x128xf32>
      %cst_29 = arith.constant 0.000000e+00 : f32
      %376 = vector.broadcast %cst_29 : f32 to vector<8x128xf32>
      %377 = arith.subf %376, %263 : vector<8x128xf32>
      %378 = arith.mulf %304, %260 : vector<8x128xf32>
      %379 = arith.mulf %305, %375 : vector<8x128xf32>
      %380 = arith.subf %378, %379 : vector<8x128xf32>
      %381 = arith.mulf %304, %375 : vector<8x128xf32>
      %382 = arith.mulf %305, %260 : vector<8x128xf32>
      %383 = arith.addf %381, %382 : vector<8x128xf32>
      %384 = arith.mulf %318, %262 : vector<8x128xf32>
      %385 = arith.mulf %319, %377 : vector<8x128xf32>
      %386 = arith.subf %384, %385 : vector<8x128xf32>
      %387 = arith.mulf %318, %377 : vector<8x128xf32>
      %388 = arith.mulf %319, %262 : vector<8x128xf32>
      %389 = arith.addf %387, %388 : vector<8x128xf32>
      %390 = arith.addf %380, %386 : vector<8x128xf32>
      %391 = arith.addf %383, %389 : vector<8x128xf32>
      %c0_30 = arith.constant 0 : index
      %392 = arith.index_cast %4 : i32 to index
      %c0_31 = arith.constant 0 : index
      %393 = vector.load %arg3[%c0_30, %392, %c0_31] : memref<8x32x128xf32, #tpu.memory_space<vmem>>, vector<1x8x128xf32>
      %394 = vector.shape_cast %393 : vector<1x8x128xf32> to vector<8x128xf32>
      %395 = vector.shape_cast %336 : vector<8x128xf32> to vector<1x8x128xf32>
      tpu.vector_store %arg3[%c0_30, %392, %c0_31], %395 {strides = array<i32>} : memref<8x32x128xf32, #tpu.memory_space<vmem>>, vector<1x8x128xf32>,
      %c1_32 = arith.constant 1 : index
      %396 = arith.index_cast %4 : i32 to index
      %c0_33 = arith.constant 0 : index
      %397 = vector.load %arg3[%c1_32, %396, %c0_33] : memref<8x32x128xf32, #tpu.memory_space<vmem>>, vector<1x8x128xf32>
      %398 = vector.shape_cast %397 : vector<1x8x128xf32> to vector<8x128xf32>
      %399 = vector.shape_cast %354 : vector<8x128xf32> to vector<1x8x128xf32>
      tpu.vector_store %arg3[%c1_32, %396, %c0_33], %399 {strides = array<i32>} : memref<8x32x128xf32, #tpu.memory_space<vmem>>, vector<1x8x128xf32>,
      %c2_34 = arith.constant 2 : index
      %400 = arith.index_cast %4 : i32 to index
      %c0_35 = arith.constant 0 : index
      %401 = vector.load %arg3[%c2_34, %400, %c0_35] : memref<8x32x128xf32, #tpu.memory_space<vmem>>, vector<1x8x128xf32>
      %402 = vector.shape_cast %401 : vector<1x8x128xf32> to vector<8x128xf32>
      %403 = vector.shape_cast %372 : vector<8x128xf32> to vector<1x8x128xf32>
      tpu.vector_store %arg3[%c2_34, %400, %c0_35], %403 {strides = array<i32>} : memref<8x32x128xf32, #tpu.memory_space<vmem>>, vector<1x8x128xf32>,
      %c3_36 = arith.constant 3 : index
      %404 = arith.index_cast %4 : i32 to index
      %c0_37 = arith.constant 0 : index
      %405 = vector.load %arg3[%c3_36, %404, %c0_37] : memref<8x32x128xf32, #tpu.memory_space<vmem>>, vector<1x8x128xf32>
      %406 = vector.shape_cast %405 : vector<1x8x128xf32> to vector<8x128xf32>
      %407 = vector.shape_cast %390 : vector<8x128xf32> to vector<1x8x128xf32>
      tpu.vector_store %arg3[%c3_36, %404, %c0_37], %407 {strides = array<i32>} : memref<8x32x128xf32, #tpu.memory_space<vmem>>, vector<1x8x128xf32>,
      %c4_38 = arith.constant 4 : index
      %408 = arith.index_cast %4 : i32 to index
      %c0_39 = arith.constant 0 : index
      %409 = vector.load %arg3[%c4_38, %408, %c0_39] : memref<8x32x128xf32, #tpu.memory_space<vmem>>, vector<1x8x128xf32>
      %410 = vector.shape_cast %409 : vector<1x8x128xf32> to vector<8x128xf32>
      %411 = vector.shape_cast %337 : vector<8x128xf32> to vector<1x8x128xf32>
      tpu.vector_store %arg3[%c4_38, %408, %c0_39], %411 {strides = array<i32>} : memref<8x32x128xf32, #tpu.memory_space<vmem>>, vector<1x8x128xf32>,
      %c5_40 = arith.constant 5 : index
      %412 = arith.index_cast %4 : i32 to index
      %c0_41 = arith.constant 0 : index
      %413 = vector.load %arg3[%c5_40, %412, %c0_41] : memref<8x32x128xf32, #tpu.memory_space<vmem>>, vector<1x8x128xf32>
      %414 = vector.shape_cast %413 : vector<1x8x128xf32> to vector<8x128xf32>
      %415 = vector.shape_cast %355 : vector<8x128xf32> to vector<1x8x128xf32>
      tpu.vector_store %arg3[%c5_40, %412, %c0_41], %415 {strides = array<i32>} : memref<8x32x128xf32, #tpu.memory_space<vmem>>, vector<1x8x128xf32>,
      %c6_42 = arith.constant 6 : index
      %416 = arith.index_cast %4 : i32 to index
      %c0_43 = arith.constant 0 : index
      %417 = vector.load %arg3[%c6_42, %416, %c0_43] : memref<8x32x128xf32, #tpu.memory_space<vmem>>, vector<1x8x128xf32>
      %418 = vector.shape_cast %417 : vector<1x8x128xf32> to vector<8x128xf32>
      %419 = vector.shape_cast %373 : vector<8x128xf32> to vector<1x8x128xf32>
      tpu.vector_store %arg3[%c6_42, %416, %c0_43], %419 {strides = array<i32>} : memref<8x32x128xf32, #tpu.memory_space<vmem>>, vector<1x8x128xf32>,
      %c7_44 = arith.constant 7 : index
      %420 = arith.index_cast %4 : i32 to index
      %c0_45 = arith.constant 0 : index
      %421 = vector.load %arg3[%c7_44, %420, %c0_45] : memref<8x32x128xf32, #tpu.memory_space<vmem>>, vector<1x8x128xf32>
      %422 = vector.shape_cast %421 : vector<1x8x128xf32> to vector<8x128xf32>
      %423 = vector.shape_cast %391 : vector<8x128xf32> to vector<1x8x128xf32>
      tpu.vector_store %arg3[%c7_44, %420, %c0_45], %423 {strides = array<i32>} : memref<8x32x128xf32, #tpu.memory_space<vmem>>, vector<1x8x128xf32>,
    }
    %c4_i32_0 = arith.constant 4 : i32
    return
  }
  func.func @transform_0(%arg0: i32) -> i32 {
    %c0_i32 = arith.constant 0 : i32
    %c0_i32_0 = arith.constant 0 : i32
    return %c0_i32 : i32
  }
  func.func @transform_1(%arg0: i32) -> (i32, i32, i32) {
    %c0_i32 = arith.constant 0 : i32
    %c0_i32_0 = arith.constant 0 : i32
    %c0_i32_1 = arith.constant 0 : i32
    return %c0_i32, %arg0, %c0_i32_0 : i32, i32, i32
  }
  func.func @transform_2(%arg0: i32) -> (i32, i32, i32) {
    %c0_i32 = arith.constant 0 : i32
    %c0_i32_0 = arith.constant 0 : i32
    %c0_i32_1 = arith.constant 0 : i32
    return %c0_i32, %arg0, %c0_i32_0 : i32, i32, i32
  }
}

</mosaic_0001>

<llo_original>
// kernel: custom-call
$region0: #{custom-call}
  %s0 = inlined_call_operand.vmem [shape: f32[8,2,2], index: 0, kind: input, shape index: {}]
  %s1 = inlined_call_operand.vmem [shape: f32[8,2,2], index: 1, kind: input, shape index: {}]
  %s2 = inlined_call_operand.hbm [shape: c64[8,2,2], index: 2, kind: output, shape index: {}]
  %s3 = scalar_lea.hbm %s2, 4
  $region1: #{custom-call} parent=0
    #allocation0 [shape = 's32[1]{0}', space=sflag, size = 0x4, scoped, tag = 'scoped memory for custom-call']
    %4 = vsyncpa [#allocation0], 0
    %s6 = sshll.u32 %s0, 4
    %s7 = int_to_ptr.vmem [resolvable:$true] %s6
    %s8 = sshll.u32 %s2, 4
    %s9 = int_to_ptr.hbm [resolvable:$true] %s8
    %11 = dma.vmem_to_hbm [thread:$0]  %s7, 64, %s9, [#allocation0]
    %13 = dma.done [#allocation0], 64
    %14 = vsyncpa [#allocation0], 1
  $region2: #{custom-call} parent=0
    #allocation1 [shape = 's32[1]{0}', space=sflag, size = 0x4, scoped, tag = 'scoped memory for custom-call']
    %15 = vsyncpa [#allocation1], 0
    %s17 = sshll.u32 %s1, 4
    %s18 = int_to_ptr.vmem [resolvable:$true] %s17
    %s19 = sshll.u32 %s3, 4
    %s20 = int_to_ptr.hbm [resolvable:$true] %s19
    %22 = dma.vmem_to_hbm [thread:$0]  %s18, 64, %s20, [#allocation1]
    %24 = dma.done [#allocation1], 64
    %25 = vsyncpa [#allocation1], 1

// kernel: classifier_forward.1
$region0: #{classifier_forward.1}
  #allocation0 [shape = 'u32[]', space=smem, size = 0x4, offset = 0x4, fixed_abs, tag = 'smem constant byte address 0x4 - core index']
  #allocation1 [shape = 'u32[72,128]{1,0:T(1,128)}', space=vmem, size = 0x9000, scoped, tag = 'internal scratch']
  %s0 = inlined_call_operand.vmem [shape: f32[24], index: 0, kind: input, shape index: {}]
  %s1 = inlined_call_operand.vmem [shape: f32[3,32,128], index: 1, kind: input, shape index: {}]
  %s2 = inlined_call_operand.vmem [shape: f32[8,32,128], index: 2, kind: output, shape index: {}]
  %s3 = sld [smem:[#allocation0]]
  $region29: #{classifier_forward.1} parent=0
    _
  %s5 = ssub.s32 1, %s3
  %s6 = scalar_select 0, %s5, %s3
  $region1: #{classifier_forward.1} parent=0
    #allocation2 [shape = 'u8[512]{0}', space=smem, size = 0x200, scoped, tag = 'input window, operand 0, single buffered']
    #allocation3 [shape = 's32[1]{0}', space=sflag, size = 0x4, scoped, tag = 'scoped memory for classifier_forward.1']
    %7 = vsyncpa [#allocation3], 0
    // Predicated region
    $region2: #{classifier_forward.1} parent=1 // pred_check
      _
    $region3: #{classifier_forward.1} parent=1 // pred_check_branch
      %9 = sbr.rel (0) target = $region5
    $region4: #{classifier_forward.1} parent=1 // pred_region
      %11 = vsyncadd [#allocation3], 0
      %s13 = sshll.u32 %s0, 4
      %s14 = int_to_ptr.vmem [resolvable:$true] %s13
      %16 = dma.vmem_to_smem %s14, 16, [#allocation2], [#allocation3]
    $region5: #{classifier_forward.1} parent=1 // pred_fallthru
      _
    // Predicated region
    $region6: #{classifier_forward.1} parent=1 // pred_check
      _
    $region7: #{classifier_forward.1} parent=1 // pred_check_branch
      %18 = sbr.rel (0) target = $region9
    $region8: #{classifier_forward.1} parent=1 // pred_region
      _
    $region9: #{classifier_forward.1} parent=1 // pred_fallthru
      _
    // Predicated region
    $region10: #{classifier_forward.1} parent=1 // pred_check
      _
    $region11: #{classifier_forward.1} parent=1 // pred_check_branch
      %20 = sbr.rel (0) target = $region13
    $region12: #{classifier_forward.1} parent=1 // pred_region
      %22 = dma.done [#allocation3], 16
    $region13: #{classifier_forward.1} parent=1 // pred_fallthru
      _
    %23 = sfence
    loop: start=0, step=1, limit=4
    $region14: #{classifier_forward.1} parent=1 // loop_pre_header
      _
    $region15: #{classifier_forward.1} parent=1 // loop_header
      %s25 = sphi 0, %s29
      %p26 = scmp.ge.s32.totalorder %s25, 4
    $region16: #{classifier_forward.1} parent=1 // loop_header_branch
      %28 = sbr.rel (%p26) target = $region20
    $region17: #{classifier_forward.1} parent=1 // loop_body
      %s30 = smul.u32 %s25, 8
      %s31 = scalar_lea.vmem %s1, %s30
      %v32 = vld [vmem:[%s31] sm:$0xff]
      %s33 = sadd.s32 %s30, 32
      %s34 = scalar_lea.vmem %s1, %s33
      %v35 = vld [vmem:[%s34] sm:$0xff]
      %s36 = sadd.s32 %s30, 64
      %s37 = scalar_lea.vmem %s1, %s36
      %v38 = vld [vmem:[%s37] sm:$0xff]
      %s39 = sld [smem:[#allocation2]]
      %v40 = vstv %s39
      %v41 = vmul.f32 %v40, %v32
      %s42 = sld [smem:[#allocation2 + $0x1]]
      %v43 = vstv %s42
      %v44 = vmul.f32 %v43, %v35
      %v45 = vadd.f32 %v41, %v44
      %s46 = sld [smem:[#allocation2 + $0x2]]
      %v47 = vstv %s46
      %v48 = vmul.f32 %v47, %v38
      %v49 = vadd.f32 %v45, %v48
      %s50 = sld [smem:[#allocation2 + $0x3]]
      %v51 = vstv %s50
      %v52 = vadd.f32 %v49, %v51
      %s53 = sld [smem:[#allocation2 + $0x4]]
      %v54 = vstv %s53
      %v55 = vmul.f32 %v54, %v32
      %s56 = sld [smem:[#allocation2 + $0x5]]
      %v57 = vstv %s56
      %v58 = vmul.f32 %v57, %v35
      %v59 = vadd.f32 %v55, %v58
      %s60 = sld [smem:[#allocation2 + $0x6]]
      %v61 = vstv %s60
      %v62 = vmul.f32 %v61, %v38
      %v63 = vadd.f32 %v59, %v62
      %s64 = sld [smem:[#allocation2 + $0x7]]
      %v65 = vstv %s64
      %v66 = vadd.f32 %v63, %v65
      %s67 = sld [smem:[#allocation2 + $0x8]]
      %v68 = vstv %s67
      %v69 = vmul.f32 %v68, %v32
      %s70 = sld [smem:[#allocation2 + $0x9]]
      %v71 = vstv %s70
      %v72 = vmul.f32 %v71, %v35
      %v73 = vadd.f32 %v69, %v72
      %s74 = sld [smem:[#allocation2 + $0xa]]
      %v75 = vstv %s74
      %v76 = vmul.f32 %v75, %v38
      %v77 = vadd.f32 %v73, %v76
      %s78 = sld [smem:[#allocation2 + $0xb]]
      %v79 = vstv %s78
      %v80 = vadd.f32 %v77, %v79
      %v81 = vand.u32 2147483647, %v52
      %vm82 = vcmp.le.f32.partialorder %v81, 0.7853982
      %vm83 = vcmp.lt.s32.totalorder %v52, 0
      %v84 = vand.u32 %v52, 2139095040
      %v85 = vshrl.u32 %v84, 23
      %v86 = vsub.s32 %v85, 127
      %v87 = vand.u32 2147483647, %v52
      %v88 = vand.u32 %v87, 8388607
      %v89 = vor.u32 %v88, 8388608
      %v90 = vsub.s32 0, %v89
      %v91 = vadd.s32 %v86, 1
      %vm92 = vcmp.gt.s32.totalorder %v91, 0
      %v93 = vsel %vm92, %v91, 0
      %v94 = vshrl.u32 %v93, 5
      %v95 = vand.u32 %v93, 31
      %v96 = vsub.s32 32, %v95
      %v97 = vshrl.u32 683565275, %v96
      %v98 = vshll.u32 683565275, %v95
      %v99 = vshrl.u32 2475754826, %v96
      %v100 = vor.u32 %v98, %v99
      %v101 = vshll.u32 2475754826, %v95
      %v102 = vshrl.u32 2131351028, %v96
      %v103 = vor.u32 %v101, %v102
      %v104 = vshll.u32 2131351028, %v95
      %v105 = vshrl.u32 2102212464, %v96
      %v106 = vor.u32 %v104, %v105
      %v107 = vshll.u32 2102212464, %v95
      %v108 = vshrl.u32 920167782, %v96
      %v109 = vor.u32 %v107, %v108
      %v110 = vshll.u32 920167782, %v95
      %v111 = vshrl.u32 1326507024, %v96
      %v112 = vor.u32 %v110, %v111
      %vm113 = vcmp.lt.s32.totalorder %v94, 1
      %vm114 = vcmp.lt.s32.totalorder %v94, 2
      %vm115 = vcmp.lt.s32.totalorder %v94, 3
      %vm116 = vcmp.lt.s32.totalorder %v94, 4
      %v117 = vsel %vm113, %v97, %v100
      %v118 = vsel %vm116, %v106, 2102212464
      %v119 = vsel %vm115, %v103, %v118
      %v120 = vsel %vm114, %v117, %v119
      %v121 = vsel %vm113, %v100, %v103
      %v122 = vsel %vm116, %v109, 920167782
      %v123 = vsel %vm115, %v106, %v122
      %v124 = vsel %vm114, %v121, %v123
      %v125 = vsel %vm113, %v103, %v106
      %v126 = vsel %vm116, %v112, 1326507024
      %v127 = vsel %vm115, %v109, %v126
      %v128 = vsel %vm114, %v125, %v127
      %v129 = vshll.u32 %v89, 8
      %v130 = vand.u32 %v129, 65535
      %v131 = vshrl.u32 %v129, 16
      %v132 = vand.u32 %v128, 65535
      %v133 = vshrl.u32 %v128, 16
      %v134 = vmul.u32 %v130, %v132
      %v135 = vmul.u32 %v130, %v133
      %v136 = vmul.u32 %v131, %v132
      %v137 = vmul.u32 %v131, %v133
      %v138 = vshll.u32 %v135, 16
      %v139 = vshrl.u32 %v135, 16
      %v140 = vshll.u32 %v136, 16
      %v141 = vshrl.u32 %v136, 16
      %vm142 = vc.u32 %v134, %v138
      %v143 = vsel %vm142, 1, 0
      %v144 = vadd.s32 %v134, %v138
      %v145 = vadd.s32 %v137, %v143
      %vm146 = vc.u32 %v144, %v140
      %v147 = vsel %vm146, 1, 0
      %v148 = vadd.s32 %v144, %v140
      %v149 = vadd.s32 %v145, %v147
      %v150 = vadd.s32 %v149, %v139
      %v151 = vadd.s32 %v150, %v141
      %v152 = vand.u32 %v129, 65535
      %v153 = vshrl.u32 %v129, 16
      %v154 = vand.u32 %v124, 65535
      %v155 = vshrl.u32 %v124, 16
      %v156 = vmul.u32 %v152, %v154
      %v157 = vmul.u32 %v152, %v155
      %v158 = vmul.u32 %v153, %v154
      %v159 = vmul.u32 %v153, %v155
      %v160 = vshll.u32 %v157, 16
      %v161 = vshrl.u32 %v157, 16
      %v162 = vshll.u32 %v158, 16
      %v163 = vshrl.u32 %v158, 16
      %vm164 = vc.u32 %v156, %v160
      %v165 = vsel %vm164, 1, 0
      %v166 = vadd.s32 %v156, %v160
      %v167 = vadd.s32 %v159, %v165
      %vm168 = vc.u32 %v166, %v162
      %v169 = vsel %vm168, 1, 0
      %v170 = vadd.s32 %v166, %v162
      %v171 = vadd.s32 %v167, %v169
      %v172 = vadd.s32 %v171, %v161
      %v173 = vadd.s32 %v172, %v163
      %v174 = vmul.u32 %v129, %v120
      %v175 = vadd.s32 %v151, %v170
      %vm176 = vc.u32 %v151, %v170
      %v177 = vadd.s32 %v173, 1
      %v178 = vsel %vm176, %v177, %v173
      %v179 = vadd.s32 %v174, %v178
      %v180 = vadd.s32 %v179, 536870912
      %v181 = vshrl.u32 %v180, 30
      %v182 = vshll.u32 %v181, 30
      %v183 = vsub.s32 %v179, %v182
      %vm184 = vcmp.lt.s32.totalorder %v183, 0
      %v185 = vsub.s32 0, %v183
      %v186 = vsel %vm184, %v185, %v183
      %v187 = vclz %v186
      %v188 = vsub.s32 %v187, 2
      %vm189 = vcmp.gt.s32.totalorder 0, %v188
      %v190 = vsel %vm189, 0, %v188
      %v191 = vsub.s32 32, %v190
      %v192 = vshll.u32 %v183, %v190
      %v193 = vshrl.u32 %v175, %v191
      %v194 = vor.u32 %v192, %v193
      %v195 = vsub.s32 4294967266, %v190
      %v196 = vadd.s32 %v195, 127
      %v197 = vshll.u32 %v196, 23
      %v198 = vor.u32 4788187, %v197
      %v199 = vand.u32 2147483647, %v198
      %v201 = vcvt.s32.f32 %v194
      %v202 = vmul.f32 %v201, %v199
      %v203 = vxor.u32 %v202, 2147483648
      %v204 = vsel %vm83, %v203, %v202
      %v205 = vsub.s32 4, %v181
      %v206 = vsel %vm83, %v205, %v181
      %v207 = vsel %vm82, %v52, %v204
      %v208 = vsel %vm82, 0, %v206
      %v209 = vmul.f32 %v207, %v207
      %v210 = vmul.f32 %v209, -0.001358992
      %v211 = vadd.f32 %v210, 0.041655596
      %v212 = vmul.f32 %v209, %v211
      %v213 = vadd.f32 %v212, -0.4999988
      %v214 = vmul.f32 %v209, %v213
      %v215 = vadd.f32 1.0, %v214
      %v216 = vmul.f32 %v207, %v207
      %v217 = vmul.f32 %v216, -0.00019511016
      %v218 = vadd.f32 %v217, 0.008332121
      %v219 = vmul.f32 %v216, %v218
      %v220 = vadd.f32 %v219, -0.16666654
      %v221 = vmul.f32 %v216, %v220
      %v222 = vadd.f32 %v221, 1.0
      %v223 = vmul.f32 %v222, %v207
      %vm224 = vweird.f32 %v52
      %v225 = vand.u32 %v208, 3
      %vm226 = vcmp.lt.s32.totalorder %v225, 2
      %vm227 = vcmp.eq.s32.totalorder %v225, 0
      %v228 = vxor.u32 %v223, 2147483648
      %v229 = vsel %vm227, %v215, %v228
      %vm230 = vcmp.eq.s32.totalorder %v225, 2
      %v231 = vxor.u32 %v215, 2147483648
      %v232 = vsel %vm230, %v231, %v223
      %v233 = vsel %vm226, %v229, %v232
      %v234 = vsel %vm224, nan, %v233
      %v235 = vand.u32 2147483647, %v52
      %vm236 = vcmp.le.f32.partialorder %v235, 0.7853982
      %vm237 = vcmp.lt.s32.totalorder %v52, 0
      %v238 = vand.u32 %v52, 2139095040
      %v239 = vshrl.u32 %v238, 23
      %v240 = vsub.s32 %v239, 127
      %v241 = vand.u32 2147483647, %v52
      %v242 = vand.u32 %v241, 8388607
      %v243 = vor.u32 %v242, 8388608
      %v244 = vsub.s32 0, %v243
      %v245 = vadd.s32 %v240, 1
      %vm246 = vcmp.gt.s32.totalorder %v245, 0
      %v247 = vsel %vm246, %v245, 0
      %v248 = vshrl.u32 %v247, 5
      %v249 = vand.u32 %v247, 31
      %v250 = vsub.s32 32, %v249
      %v251 = vshrl.u32 683565275, %v250
      %v252 = vshll.u32 683565275, %v249
      %v253 = vshrl.u32 2475754826, %v250
      %v254 = vor.u32 %v252, %v253
      %v255 = vshll.u32 2475754826, %v249
      %v256 = vshrl.u32 2131351028, %v250
      %v257 = vor.u32 %v255, %v256
      %v258 = vshll.u32 2131351028, %v249
      %v259 = vshrl.u32 2102212464, %v250
      %v260 = vor.u32 %v258, %v259
      %v261 = vshll.u32 2102212464, %v249
      %v262 = vshrl.u32 920167782, %v250
      %v263 = vor.u32 %v261, %v262
      %v264 = vshll.u32 920167782, %v249
      %v265 = vshrl.u32 1326507024, %v250
      %v266 = vor.u32 %v264, %v265
      %vm267 = vcmp.lt.s32.totalorder %v248, 1
      %vm268 = vcmp.lt.s32.totalorder %v248, 2
      %vm269 = vcmp.lt.s32.totalorder %v248, 3
      %vm270 = vcmp.lt.s32.totalorder %v248, 4
      %v271 = vsel %vm267, %v251, %v254
      %v272 = vsel %vm270, %v260, 2102212464
      %v273 = vsel %vm269, %v257, %v272
      %v274 = vsel %vm268, %v271, %v273
      %v275 = vsel %vm267, %v254, %v257
      %v276 = vsel %vm270, %v263, 920167782
      %v277 = vsel %vm269, %v260, %v276
      %v278 = vsel %vm268, %v275, %v277
      %v279 = vsel %vm267, %v257, %v260
      %v280 = vsel %vm270, %v266, 1326507024
      %v281 = vsel %vm269, %v263, %v280
      %v282 = vsel %vm268, %v279, %v281
      %v283 = vshll.u32 %v243, 8
      %v284 = vand.u32 %v283, 65535
      %v285 = vshrl.u32 %v283, 16
      %v286 = vand.u32 %v282, 65535
      %v287 = vshrl.u32 %v282, 16
      %v288 = vmul.u32 %v284, %v286
      %v289 = vmul.u32 %v284, %v287
      %v290 = vmul.u32 %v285, %v286
      %v291 = vmul.u32 %v285, %v287
      %v292 = vshll.u32 %v289, 16
      %v293 = vshrl.u32 %v289, 16
      %v294 = vshll.u32 %v290, 16
      %v295 = vshrl.u32 %v290, 16
      %vm296 = vc.u32 %v288, %v292
      %v297 = vsel %vm296, 1, 0
      %v298 = vadd.s32 %v288, %v292
      %v299 = vadd.s32 %v291, %v297
      %vm300 = vc.u32 %v298, %v294
      %v301 = vsel %vm300, 1, 0
      %v302 = vadd.s32 %v298, %v294
      %v303 = vadd.s32 %v299, %v301
      %v304 = vadd.s32 %v303, %v293
      %v305 = vadd.s32 %v304, %v295
      %v306 = vand.u32 %v283, 65535
      %v307 = vshrl.u32 %v283, 16
      %v308 = vand.u32 %v278, 65535
      %v309 = vshrl.u32 %v278, 16
      %v310 = vmul.u32 %v306, %v308
      %v311 = vmul.u32 %v306, %v309
      %v312 = vmul.u32 %v307, %v308
      %v313 = vmul.u32 %v307, %v309
      %v314 = vshll.u32 %v311, 16
      %v315 = vshrl.u32 %v311, 16
      %v316 = vshll.u32 %v312, 16
      %v317 = vshrl.u32 %v312, 16
      %vm318 = vc.u32 %v310, %v314
      %v319 = vsel %vm318, 1, 0
      %v320 = vadd.s32 %v310, %v314
      %v321 = vadd.s32 %v313, %v319
      %vm322 = vc.u32 %v320, %v316
      %v323 = vsel %vm322, 1, 0
      %v324 = vadd.s32 %v320, %v316
      %v325 = vadd.s32 %v321, %v323
      %v326 = vadd.s32 %v325, %v315
      %v327 = vadd.s32 %v326, %v317
      %v328 = vmul.u32 %v283, %v274
      %v329 = vadd.s32 %v305, %v324
      %vm330 = vc.u32 %v305, %v324
      %v331 = vadd.s32 %v327, 1
      %v332 = vsel %vm330, %v331, %v327
      %v333 = vadd.s32 %v328, %v332
      %v334 = vadd.s32 %v333, 536870912
      %v335 = vshrl.u32 %v334, 30
      %v336 = vshll.u32 %v335, 30
      %v337 = vsub.s32 %v333, %v336
      %vm338 = vcmp.lt.s32.totalorder %v337, 0
      %v339 = vsub.s32 0, %v337
      %v340 = vsel %vm338, %v339, %v337
      %v341 = vclz %v340
      %v342 = vsub.s32 %v341, 2
      %vm343 = vcmp.gt.s32.totalorder 0, %v342
      %v344 = vsel %vm343, 0, %v342
      %v345 = vsub.s32 32, %v344
      %v346 = vshll.u32 %v337, %v344
      %v347 = vshrl.u32 %v329, %v345
      %v348 = vor.u32 %v346, %v347
      %v349 = vsub.s32 4294967266, %v344
      %v350 = vadd.s32 %v349, 127
      %v351 = vshll.u32 %v350, 23
      %v352 = vor.u32 4788187, %v351
      %v353 = vand.u32 2147483647, %v352
      %v355 = vcvt.s32.f32 %v348
      %v356 = vmul.f32 %v355, %v353
      %v357 = vxor.u32 %v356, 2147483648
      %v358 = vsel %vm237, %v357, %v356
      %v359 = vsub.s32 4, %v335
      %v360 = vsel %vm237, %v359, %v335
      %v361 = vsel %vm236, %v52, %v358
      %v362 = vsel %vm236, 0, %v360
      %v363 = vmul.f32 %v361, %v361
      %v364 = vmul.f32 %v363, -0.001358992
      %v365 = vadd.f32 %v364, 0.041655596
      %v366 = vmul.f32 %v363, %v365
      %v367 = vadd.f32 %v366, -0.4999988
      %v368 = vmul.f32 %v363, %v367
      %v369 = vadd.f32 1.0, %v368
      %v370 = vmul.f32 %v361, %v361
      %v371 = vmul.f32 %v370, -0.00019511016
      %v372 = vadd.f32 %v371, 0.008332121
      %v373 = vmul.f32 %v370, %v372
      %v374 = vadd.f32 %v373, -0.16666654
      %v375 = vmul.f32 %v370, %v374
      %v376 = vadd.f32 %v375, 1.0
      %v377 = vmul.f32 %v376, %v361
      %vm378 = vweird.f32 %v52
      %v379 = vadd.s32 %v362, 3
      %v380 = vand.u32 %v379, 3
      %vm381 = vcmp.lt.s32.totalorder %v380, 2
      %vm382 = vcmp.eq.s32.totalorder %v380, 0
      %v383 = vxor.u32 %v377, 2147483648
      %v384 = vsel %vm382, %v369, %v383
      %vm385 = vcmp.eq.s32.totalorder %v380, 2
      %v386 = vxor.u32 %v369, 2147483648
      %v387 = vsel %vm385, %v386, %v377
      %v388 = vsel %vm381, %v384, %v387
      %v389 = vsel %vm378, nan, %v388
      %v390 = vand.u32 2147483647, %v66
      %vm391 = vcmp.le.f32.partialorder %v390, 0.7853982
      %vm392 = vcmp.lt.s32.totalorder %v66, 0
      %v393 = vand.u32 %v66, 2139095040
      %v394 = vshrl.u32 %v393, 23
      %v395 = vsub.s32 %v394, 127
      %v396 = vand.u32 2147483647, %v66
      %v397 = vand.u32 %v396, 8388607
      %v398 = vor.u32 %v397, 8388608
      %v399 = vsub.s32 0, %v398
      %v400 = vadd.s32 %v395, 1
      %vm401 = vcmp.gt.s32.totalorder %v400, 0
      %v402 = vsel %vm401, %v400, 0
      %v403 = vshrl.u32 %v402, 5
      %v404 = vand.u32 %v402, 31
      %v405 = vsub.s32 32, %v404
      %v406 = vshrl.u32 683565275, %v405
      %v407 = vshll.u32 683565275, %v404
      %v408 = vshrl.u32 2475754826, %v405
      %v409 = vor.u32 %v407, %v408
      %v410 = vshll.u32 2475754826, %v404
      %v411 = vshrl.u32 2131351028, %v405
      %v412 = vor.u32 %v410, %v411
      %v413 = vshll.u32 2131351028, %v404
      %v414 = vshrl.u32 2102212464, %v405
      %v415 = vor.u32 %v413, %v414
      %v416 = vshll.u32 2102212464, %v404
      %v417 = vshrl.u32 920167782, %v405
      %v418 = vor.u32 %v416, %v417
      %v419 = vshll.u32 920167782, %v404
      %v420 = vshrl.u32 1326507024, %v405
      %v421 = vor.u32 %v419, %v420
      %vm422 = vcmp.lt.s32.totalorder %v403, 1
      %vm423 = vcmp.lt.s32.totalorder %v403, 2
      %vm424 = vcmp.lt.s32.totalorder %v403, 3
      %vm425 = vcmp.lt.s32.totalorder %v403, 4
      %v426 = vsel %vm422, %v406, %v409
      %v427 = vsel %vm425, %v415, 2102212464
      %v428 = vsel %vm424, %v412, %v427
      %v429 = vsel %vm423, %v426, %v428
      %v430 = vsel %vm422, %v409, %v412
      %v431 = vsel %vm425, %v418, 920167782
      %v432 = vsel %vm424, %v415, %v431
      %v433 = vsel %vm423, %v430, %v432
      %v434 = vsel %vm422, %v412, %v415
      %v435 = vsel %vm425, %v421, 1326507024
      %v436 = vsel %vm424, %v418, %v435
      %v437 = vsel %vm423, %v434, %v436
      %v438 = vshll.u32 %v398, 8
      %v439 = vand.u32 %v438, 65535
      %v440 = vshrl.u32 %v438, 16
      %v441 = vand.u32 %v437, 65535
      %v442 = vshrl.u32 %v437, 16
      %v443 = vmul.u32 %v439, %v441
      %v444 = vmul.u32 %v439, %v442
      %v445 = vmul.u32 %v440, %v441
      %v446 = vmul.u32 %v440, %v442
      %v447 = vshll.u32 %v444, 16
      %v448 = vshrl.u32 %v444, 16
      %v449 = vshll.u32 %v445, 16
      %v450 = vshrl.u32 %v445, 16
      %vm451 = vc.u32 %v443, %v447
      %v452 = vsel %vm451, 1, 0
      %v453 = vadd.s32 %v443, %v447
      %v454 = vadd.s32 %v446, %v452
      %vm455 = vc.u32 %v453, %v449
      %v456 = vsel %vm455, 1, 0
      %v457 = vadd.s32 %v453, %v449
      %v458 = vadd.s32 %v454, %v456
      %v459 = vadd.s32 %v458, %v448
      %v460 = vadd.s32 %v459, %v450
      %v461 = vand.u32 %v438, 65535
      %v462 = vshrl.u32 %v438, 16
      %v463 = vand.u32 %v433, 65535
      %v464 = vshrl.u32 %v433, 16
      %v465 = vmul.u32 %v461, %v463
      %v466 = vmul.u32 %v461, %v464
      %v467 = vmul.u32 %v462, %v463
      %v468 = vmul.u32 %v462, %v464
      %v469 = vshll.u32 %v466, 16
      %v470 = vshrl.u32 %v466, 16
      %v471 = vshll.u32 %v467, 16
      %v472 = vshrl.u32 %v467, 16
      %vm473 = vc.u32 %v465, %v469
      %v474 = vsel %vm473, 1, 0
      %v475 = vadd.s32 %v465, %v469
      %v476 = vadd.s32 %v468, %v474
      %vm477 = vc.u32 %v475, %v471
      %v478 = vsel %vm477, 1, 0
      %v479 = vadd.s32 %v475, %v471
      %v480 = vadd.s32 %v476, %v478
      %v481 = vadd.s32 %v480, %v470
      %v482 = vadd.s32 %v481, %v472
      %v483 = vmul.u32 %v438, %v429
      %v484 = vadd.s32 %v460, %v479
      %vm485 = vc.u32 %v460, %v479
      %v486 = vadd.s32 %v482, 1
      %v487 = vsel %vm485, %v486, %v482
      %v488 = vadd.s32 %v483, %v487
      %v489 = vadd.s32 %v488, 536870912
      %v490 = vshrl.u32 %v489, 30
      %v491 = vshll.u32 %v490, 30
      %v492 = vsub.s32 %v488, %v491
      %vm493 = vcmp.lt.s32.totalorder %v492, 0
      %v494 = vsub.s32 0, %v492
      %v495 = vsel %vm493, %v494, %v492
      %v496 = vclz %v495
      %v497 = vsub.s32 %v496, 2
      %vm498 = vcmp.gt.s32.totalorder 0, %v497
      %v499 = vsel %vm498, 0, %v497
      %v500 = vsub.s32 32, %v499
      %v501 = vshll.u32 %v492, %v499
      %v502 = vshrl.u32 %v484, %v500
      %v503 = vor.u32 %v501, %v502
      %v504 = vsub.s32 4294967266, %v499
      %v505 = vadd.s32 %v504, 127
      %v506 = vshll.u32 %v505, 23
      %v507 = vor.u32 4788187, %v506
      %v508 = vand.u32 2147483647, %v507
      %v510 = vcvt.s32.f32 %v503
      %v511 = vmul.f32 %v510, %v508
      %v512 = vxor.u32 %v511, 2147483648
      %v513 = vsel %vm392, %v512, %v511
      %v514 = vsub.s32 4, %v490
      %v515 = vsel %vm392, %v514, %v490
      %v516 = vsel %vm391, %v66, %v513
      %v517 = vsel %vm391, 0, %v515
      %v518 = vmul.f32 %v516, %v516
      %v519 = vmul.f32 %v518, -0.001358992
      %v520 = vadd.f32 %v519, 0.041655596
      %v521 = vmul.f32 %v518, %v520
      %v522 = vadd.f32 %v521, -0.4999988
      %v523 = vmul.f32 %v518, %v522
      %v524 = vadd.f32 1.0, %v523
      %v525 = vmul.f32 %v516, %v516
      %v526 = vmul.f32 %v525, -0.00019511016
      %v527 = vadd.f32 %v526, 0.008332121
      %v528 = vmul.f32 %v525, %v527
      %v529 = vadd.f32 %v528, -0.16666654
      %v530 = vmul.f32 %v525, %v529
      %v531 = vadd.f32 %v530, 1.0
      %v532 = vmul.f32 %v531, %v516
      %vm533 = vweird.f32 %v66
      %v534 = vand.u32 %v517, 3
      %vm535 = vcmp.lt.s32.totalorder %v534, 2
      %vm536 = vcmp.eq.s32.totalorder %v534, 0
      %v537 = vxor.u32 %v532, 2147483648
      %v538 = vsel %vm536, %v524, %v537
      %vm539 = vcmp.eq.s32.totalorder %v534, 2
      %v540 = vxor.u32 %v524, 2147483648
      %v541 = vsel %vm539, %v540, %v532
      %v542 = vsel %vm535, %v538, %v541
      %v543 = vsel %vm533, nan, %v542
      %v544 = vand.u32 2147483647, %v66
      %vm545 = vcmp.le.f32.partialorder %v544, 0.7853982
      %vm546 = vcmp.lt.s32.totalorder %v66, 0
      %v547 = vand.u32 %v66, 2139095040
      %v548 = vshrl.u32 %v547, 23
      %v549 = vsub.s32 %v548, 127
      %v550 = vand.u32 2147483647, %v66
      %v551 = vand.u32 %v550, 8388607
      %v552 = vor.u32 %v551, 8388608
      %v553 = vsub.s32 0, %v552
      %v554 = vadd.s32 %v549, 1
      %vm555 = vcmp.gt.s32.totalorder %v554, 0
      %v556 = vsel %vm555, %v554, 0
      %v557 = vshrl.u32 %v556, 5
      %v558 = vand.u32 %v556, 31
      %v559 = vsub.s32 32, %v558
      %v560 = vshrl.u32 683565275, %v559
      %v561 = vshll.u32 683565275, %v558
      %v562 = vshrl.u32 2475754826, %v559
      %v563 = vor.u32 %v561, %v562
      %v564 = vshll.u32 2475754826, %v558
      %v565 = vshrl.u32 2131351028, %v559
      %v566 = vor.u32 %v564, %v565
      %v567 = vshll.u32 2131351028, %v558
      %v568 = vshrl.u32 2102212464, %v559
      %v569 = vor.u32 %v567, %v568
      %v570 = vshll.u32 2102212464, %v558
      %v571 = vshrl.u32 920167782, %v559
      %v572 = vor.u32 %v570, %v571
      %v573 = vshll.u32 920167782, %v558
      %v574 = vshrl.u32 1326507024, %v559
      %v575 = vor.u32 %v573, %v574
      %vm576 = vcmp.lt.s32.totalorder %v557, 1
      %vm577 = vcmp.lt.s32.totalorder %v557, 2
      %vm578 = vcmp.lt.s32.totalorder %v557, 3
      %vm579 = vcmp.lt.s32.totalorder %v557, 4
      %v580 = vsel %vm576, %v560, %v563
      %v581 = vsel %vm579, %v569, 2102212464
      %v582 = vsel %vm578, %v566, %v581
      %v583 = vsel %vm577, %v580, %v582
      %v584 = vsel %vm576, %v563, %v566
      %v585 = vsel %vm579, %v572, 920167782
      %v586 = vsel %vm578, %v569, %v585
      %v587 = vsel %vm577, %v584, %v586
      %v588 = vsel %vm576, %v566, %v569
      %v589 = vsel %vm579, %v575, 1326507024
      %v590 = vsel %vm578, %v572, %v589
      %v591 = vsel %vm577, %v588, %v590
      %v592 = vshll.u32 %v552, 8
      %v593 = vand.u32 %v592, 65535
      %v594 = vshrl.u32 %v592, 16
      %v595 = vand.u32 %v591, 65535
      %v596 = vshrl.u32 %v591, 16
      %v597 = vmul.u32 %v593, %v595
      %v598 = vmul.u32 %v593, %v596
      %v599 = vmul.u32 %v594, %v595
      %v600 = vmul.u32 %v594, %v596
      %v601 = vshll.u32 %v598, 16
      %v602 = vshrl.u32 %v598, 16
      %v603 = vshll.u32 %v599, 16
      %v604 = vshrl.u32 %v599, 16
      %vm605 = vc.u32 %v597, %v601
      %v606 = vsel %vm605, 1, 0
      %v607 = vadd.s32 %v597, %v601
      %v608 = vadd.s32 %v600, %v606
      %vm609 = vc.u32 %v607, %v603
      %v610 = vsel %vm609, 1, 0
      %v611 = vadd.s32 %v607, %v603
      %v612 = vadd.s32 %v608, %v610
      %v613 = vadd.s32 %v612, %v602
      %v614 = vadd.s32 %v613, %v604
      %v615 = vand.u32 %v592, 65535
      %v616 = vshrl.u32 %v592, 16
      %v617 = vand.u32 %v587, 65535
      %v618 = vshrl.u32 %v587, 16
      %v619 = vmul.u32 %v615, %v617
      %v620 = vmul.u32 %v615, %v618
      %v621 = vmul.u32 %v616, %v617
      %v622 = vmul.u32 %v616, %v618
      %v623 = vshll.u32 %v620, 16
      %v624 = vshrl.u32 %v620, 16
      %v625 = vshll.u32 %v621, 16
      %v626 = vshrl.u32 %v621, 16
      %vm627 = vc.u32 %v619, %v623
      %v628 = vsel %vm627, 1, 0
      %v629 = vadd.s32 %v619, %v623
      %v630 = vadd.s32 %v622, %v628
      %vm631 = vc.u32 %v629, %v625
      %v632 = vsel %vm631, 1, 0
      %v633 = vadd.s32 %v629, %v625
      %v634 = vadd.s32 %v630, %v632
      %v635 = vadd.s32 %v634, %v624
      %v636 = vadd.s32 %v635, %v626
      %v637 = vmul.u32 %v592, %v583
      %v638 = vadd.s32 %v614, %v633
      %vm639 = vc.u32 %v614, %v633
      %v640 = vadd.s32 %v636, 1
      %v641 = vsel %vm639, %v640, %v636
      %v642 = vadd.s32 %v637, %v641
      %v643 = vadd.s32 %v642, 536870912
      %v644 = vshrl.u32 %v643, 30
      %v645 = vshll.u32 %v644, 30
      %v646 = vsub.s32 %v642, %v645
      %vm647 = vcmp.lt.s32.totalorder %v646, 0
      %v648 = vsub.s32 0, %v646
      %v649 = vsel %vm647, %v648, %v646
      %v650 = vclz %v649
      %v651 = vsub.s32 %v650, 2
      %vm652 = vcmp.gt.s32.totalorder 0, %v651
      %v653 = vsel %vm652, 0, %v651
      %v654 = vsub.s32 32, %v653
      %v655 = vshll.u32 %v646, %v653
      %v656 = vshrl.u32 %v638, %v654
      %v657 = vor.u32 %v655, %v656
      %v658 = vsub.s32 4294967266, %v653
      %v659 = vadd.s32 %v658, 127
      %v660 = vshll.u32 %v659, 23
      %v661 = vor.u32 4788187, %v660
      %v662 = vand.u32 2147483647, %v661
      %v664 = vcvt.s32.f32 %v657
      %v665 = vmul.f32 %v664, %v662
      %v666 = vxor.u32 %v665, 2147483648
      %v667 = vsel %vm546, %v666, %v665
      %v668 = vsub.s32 4, %v644
      %v669 = vsel %vm546, %v668, %v644
      %v670 = vsel %vm545, %v66, %v667
      %v671 = vsel %vm545, 0, %v669
      %v672 = vmul.f32 %v670, %v670
      %v673 = vmul.f32 %v672, -0.001358992
      %v674 = vadd.f32 %v673, 0.041655596
      %v675 = vmul.f32 %v672, %v674
      %v676 = vadd.f32 %v675, -0.4999988
      %v677 = vmul.f32 %v672, %v676
      %v678 = vadd.f32 1.0, %v677
      %v679 = vmul.f32 %v670, %v670
      %v680 = vmul.f32 %v679, -0.00019511016
      %v681 = vadd.f32 %v680, 0.008332121
      %v682 = vmul.f32 %v679, %v681
      %v683 = vadd.f32 %v682, -0.16666654
      %v684 = vmul.f32 %v679, %v683
      %v685 = vadd.f32 %v684, 1.0
      %v686 = vmul.f32 %v685, %v670
      %vm687 = vweird.f32 %v66
      %v688 = vadd.s32 %v671, 3
      %v689 = vand.u32 %v688, 3
      %vm690 = vcmp.lt.s32.totalorder %v689, 2
      %vm691 = vcmp.eq.s32.totalorder %v689, 0
      %v692 = vxor.u32 %v686, 2147483648
      %v693 = vsel %vm691, %v678, %v692
      %vm694 = vcmp.eq.s32.totalorder %v689, 2
      %v695 = vxor.u32 %v678, 2147483648
      %v696 = vsel %vm694, %v695, %v686
      %v697 = vsel %vm690, %v693, %v696
      %v698 = vsel %vm687, nan, %v697
      %v699 = vand.u32 2147483647, %v80
      %vm700 = vcmp.le.f32.partialorder %v699, 0.7853982
      %vm701 = vcmp.lt.s32.totalorder %v80, 0
      %v702 = vand.u32 %v80, 2139095040
      %v703 = vshrl.u32 %v702, 23
      %v704 = vsub.s32 %v703, 127
      %v705 = vand.u32 2147483647, %v80
      %v706 = vand.u32 %v705, 8388607
      %v707 = vor.u32 %v706, 8388608
      %v708 = vsub.s32 0, %v707
      %v709 = vadd.s32 %v704, 1
      %vm710 = vcmp.gt.s32.totalorder %v709, 0
      %v711 = vsel %vm710, %v709, 0
      %v712 = vshrl.u32 %v711, 5
      %v713 = vand.u32 %v711, 31
      %v714 = vsub.s32 32, %v713
      %v715 = vshrl.u32 683565275, %v714
      %v716 = vshll.u32 683565275, %v713
      %v717 = vshrl.u32 2475754826, %v714
      %v718 = vor.u32 %v716, %v717
      %v719 = vshll.u32 2475754826, %v713
      %v720 = vshrl.u32 2131351028, %v714
      %v721 = vor.u32 %v719, %v720
      %v722 = vshll.u32 2131351028, %v713
      %v723 = vshrl.u32 2102212464, %v714
      %v724 = vor.u32 %v722, %v723
      %v725 = vshll.u32 2102212464, %v713
      %v726 = vshrl.u32 920167782, %v714
      %v727 = vor.u32 %v725, %v726
      %v728 = vshll.u32 920167782, %v713
      %v729 = vshrl.u32 1326507024, %v714
      %v730 = vor.u32 %v728, %v729
      %vm731 = vcmp.lt.s32.totalorder %v712, 1
      %vm732 = vcmp.lt.s32.totalorder %v712, 2
      %vm733 = vcmp.lt.s32.totalorder %v712, 3
      %vm734 = vcmp.lt.s32.totalorder %v712, 4
      %v735 = vsel %vm731, %v715, %v718
      %v736 = vsel %vm734, %v724, 2102212464
      %v737 = vsel %vm733, %v721, %v736
      %v738 = vsel %vm732, %v735, %v737
      %v739 = vsel %vm731, %v718, %v721
      %v740 = vsel %vm734, %v727, 920167782
      %v741 = vsel %vm733, %v724, %v740
      %v742 = vsel %vm732, %v739, %v741
      %v743 = vsel %vm731, %v721, %v724
      %v744 = vsel %vm734, %v730, 1326507024
      %v745 = vsel %vm733, %v727, %v744
      %v746 = vsel %vm732, %v743, %v745
      %v747 = vshll.u32 %v707, 8
      %v748 = vand.u32 %v747, 65535
      %v749 = vshrl.u32 %v747, 16
      %v750 = vand.u32 %v746, 65535
      %v751 = vshrl.u32 %v746, 16
      %v752 = vmul.u32 %v748, %v750
      %v753 = vmul.u32 %v748, %v751
      %v754 = vmul.u32 %v749, %v750
      %v755 = vmul.u32 %v749, %v751
      %v756 = vshll.u32 %v753, 16
      %v757 = vshrl.u32 %v753, 16
      %v758 = vshll.u32 %v754, 16
      %v759 = vshrl.u32 %v754, 16
      %vm760 = vc.u32 %v752, %v756
      %v761 = vsel %vm760, 1, 0
      %v762 = vadd.s32 %v752, %v756
      %v763 = vadd.s32 %v755, %v761
      %vm764 = vc.u32 %v762, %v758
      %v765 = vsel %vm764, 1, 0
      %v766 = vadd.s32 %v762, %v758
      %v767 = vadd.s32 %v763, %v765
      %v768 = vadd.s32 %v767, %v757
      %v769 = vadd.s32 %v768, %v759
      %v770 = vand.u32 %v747, 65535
      %v771 = vshrl.u32 %v747, 16
      %v772 = vand.u32 %v742, 65535
      %v773 = vshrl.u32 %v742, 16
      %v774 = vmul.u32 %v770, %v772
      %v775 = vmul.u32 %v770, %v773
      %v776 = vmul.u32 %v771, %v772
      %v777 = vmul.u32 %v771, %v773
      %v778 = vshll.u32 %v775, 16
      %v779 = vshrl.u32 %v775, 16
      %v780 = vshll.u32 %v776, 16
      %v781 = vshrl.u32 %v776, 16
      %vm782 = vc.u32 %v774, %v778
      %v783 = vsel %vm782, 1, 0
      %v784 = vadd.s32 %v774, %v778
      %v785 = vadd.s32 %v777, %v783
      %vm786 = vc.u32 %v784, %v780
      %v787 = vsel %vm786, 1, 0
      %v788 = vadd.s32 %v784, %v780
      %v789 = vadd.s32 %v785, %v787
      %v790 = vadd.s32 %v789, %v779
      %v791 = vadd.s32 %v790, %v781
      %v792 = vmul.u32 %v747, %v738
      %v793 = vadd.s32 %v769, %v788
      %vm794 = vc.u32 %v769, %v788
      %v795 = vadd.s32 %v791, 1
      %v796 = vsel %vm794, %v795, %v791
      %v797 = vadd.s32 %v792, %v796
      %v798 = vadd.s32 %v797, 536870912
      %v799 = vshrl.u32 %v798, 30
      %v800 = vshll.u32 %v799, 30
      %v801 = vsub.s32 %v797, %v800
      %vm802 = vcmp.lt.s32.totalorder %v801, 0
      %v803 = vsub.s32 0, %v801
      %v804 = vsel %vm802, %v803, %v801
      %v805 = vclz %v804
      %v806 = vsub.s32 %v805, 2
      %vm807 = vcmp.gt.s32.totalorder 0, %v806
      %v808 = vsel %vm807, 0, %v806
      %v809 = vsub.s32 32, %v808
      %v810 = vshll.u32 %v801, %v808
      %v811 = vshrl.u32 %v793, %v809
      %v812 = vor.u32 %v810, %v811
      %v813 = vsub.s32 4294967266, %v808
      %v814 = vadd.s32 %v813, 127
      %v815 = vshll.u32 %v814, 23
      %v816 = vor.u32 4788187, %v815
      %v817 = vand.u32 2147483647, %v816
      %v819 = vcvt.s32.f32 %v812
      %v820 = vmul.f32 %v819, %v817
      %v821 = vxor.u32 %v820, 2147483648
      %v822 = vsel %vm701, %v821, %v820
      %v823 = vsub.s32 4, %v799
      %v824 = vsel %vm701, %v823, %v799
      %v825 = vsel %vm700, %v80, %v822
      %v826 = vsel %vm700, 0, %v824
      %v827 = vmul.f32 %v825, %v825
      %v828 = vmul.f32 %v827, -0.001358992
      %v829 = vadd.f32 %v828, 0.041655596
      %v830 = vmul.f32 %v827, %v829
      %v831 = vadd.f32 %v830, -0.4999988
      %v832 = vmul.f32 %v827, %v831
      %v833 = vadd.f32 1.0, %v832
      %v834 = vmul.f32 %v825, %v825
      %v835 = vmul.f32 %v834, -0.00019511016
      %v836 = vadd.f32 %v835, 0.008332121
      %v837 = vmul.f32 %v834, %v836
      %v838 = vadd.f32 %v837, -0.16666654
      %v839 = vmul.f32 %v834, %v838
      %v840 = vadd.f32 %v839, 1.0
      %v841 = vmul.f32 %v840, %v825
      %vm842 = vweird.f32 %v80
      %v843 = vand.u32 %v826, 3
      %vm844 = vcmp.lt.s32.totalorder %v843, 2
      %vm845 = vcmp.eq.s32.totalorder %v843, 0
      %v846 = vxor.u32 %v841, 2147483648
      %v847 = vsel %vm845, %v833, %v846
      %vm848 = vcmp.eq.s32.totalorder %v843, 2
      %v849 = vxor.u32 %v833, 2147483648
      %v850 = vsel %vm848, %v849, %v841
      %v851 = vsel %vm844, %v847, %v850
      %v852 = vsel %vm842, nan, %v851
      %v853 = vand.u32 2147483647, %v80
      %vm854 = vcmp.le.f32.partialorder %v853, 0.7853982
      %vm855 = vcmp.lt.s32.totalorder %v80, 0
      %v856 = vand.u32 %v80, 2139095040
      %v857 = vshrl.u32 %v856, 23
      %v858 = vsub.s32 %v857, 127
      %v859 = vand.u32 2147483647, %v80
      %v860 = vand.u32 %v859, 8388607
      %v861 = vor.u32 %v860, 8388608
      %v862 = vsub.s32 0, %v861
      %v863 = vadd.s32 %v858, 1
      %vm864 = vcmp.gt.s32.totalorder %v863, 0
      %v865 = vsel %vm864, %v863, 0
      %v866 = vshrl.u32 %v865, 5
      %v867 = vand.u32 %v865, 31
      %v868 = vsub.s32 32, %v867
      %v869 = vshrl.u32 683565275, %v868
      %v870 = vshll.u32 683565275, %v867
      %v871 = vshrl.u32 2475754826, %v868
      %v872 = vor.u32 %v870, %v871
      %v873 = vshll.u32 2475754826, %v867
      %v874 = vshrl.u32 2131351028, %v868
      %v875 = vor.u32 %v873, %v874
      %v876 = vshll.u32 2131351028, %v867
      %v877 = vshrl.u32 2102212464, %v868
      %v878 = vor.u32 %v876, %v877
      %v879 = vshll.u32 2102212464, %v867
      %v880 = vshrl.u32 920167782, %v868
      %v881 = vor.u32 %v879, %v880
      %v882 = vshll.u32 920167782, %v867
      %v883 = vshrl.u32 1326507024, %v868
      %v884 = vor.u32 %v882, %v883
      %vm885 = vcmp.lt.s32.totalorder %v866, 1
      %vm886 = vcmp.lt.s32.totalorder %v866, 2
      %vm887 = vcmp.lt.s32.totalorder %v866, 3
      %vm888 = vcmp.lt.s32.totalorder %v866, 4
      %v889 = vsel %vm885, %v869, %v872
      %v890 = vsel %vm888, %v878, 2102212464
      %v891 = vsel %vm887, %v875, %v890
      %v892 = vsel %vm886, %v889, %v891
      %v893 = vsel %vm885, %v872, %v875
      %v894 = vsel %vm888, %v881, 920167782
      %v895 = vsel %vm887, %v878, %v894
      %v896 = vsel %vm886, %v893, %v895
      %v897 = vsel %vm885, %v875, %v878
      %v898 = vsel %vm888, %v884, 1326507024
      %v899 = vsel %vm887, %v881, %v898
      %v900 = vsel %vm886, %v897, %v899
      %v901 = vshll.u32 %v861, 8
      %v902 = vand.u32 %v901, 65535
      %v903 = vshrl.u32 %v901, 16
      %v904 = vand.u32 %v900, 65535
      %v905 = vshrl.u32 %v900, 16
      %v906 = vmul.u32 %v902, %v904
      %v907 = vmul.u32 %v902, %v905
      %v908 = vmul.u32 %v903, %v904
      %v909 = vmul.u32 %v903, %v905
      %v910 = vshll.u32 %v907, 16
      %v911 = vshrl.u32 %v907, 16
      %v912 = vshll.u32 %v908, 16
      %v913 = vshrl.u32 %v908, 16
      %vm914 = vc.u32 %v906, %v910
      %v915 = vsel %vm914, 1, 0
      %v916 = vadd.s32 %v906, %v910
      %v917 = vadd.s32 %v909, %v915
      %vm918 = vc.u32 %v916, %v912
      %v919 = vsel %vm918, 1, 0
      %v920 = vadd.s32 %v916, %v912
      %v921 = vadd.s32 %v917, %v919
      %v922 = vadd.s32 %v921, %v911
      %v923 = vadd.s32 %v922, %v913
      %v924 = vand.u32 %v901, 65535
      %v925 = vshrl.u32 %v901, 16
      %v926 = vand.u32 %v896, 65535
      %v927 = vshrl.u32 %v896, 16
      %v928 = vmul.u32 %v924, %v926
      %v929 = vmul.u32 %v924, %v927
      %v930 = vmul.u32 %v925, %v926
      %v931 = vmul.u32 %v925, %v927
      %v932 = vshll.u32 %v929, 16
      %v933 = vshrl.u32 %v929, 16
      %v934 = vshll.u32 %v930, 16
      %v935 = vshrl.u32 %v930, 16
      %vm936 = vc.u32 %v928, %v932
      %v937 = vsel %vm936, 1, 0
      %v938 = vadd.s32 %v928, %v932
      %v939 = vadd.s32 %v931, %v937
      %vm940 = vc.u32 %v938, %v934
      %v941 = vsel %vm940, 1, 0
      %v942 = vadd.s32 %v938, %v934
      %v943 = vadd.s32 %v939, %v941
      %v944 = vadd.s32 %v943, %v933
      %v945 = vadd.s32 %v944, %v935
      %v946 = vmul.u32 %v901, %v892
      %v947 = vadd.s32 %v923, %v942
      %vm948 = vc.u32 %v923, %v942
      %v949 = vadd.s32 %v945, 1
      %v950 = vsel %vm948, %v949, %v945
      %v951 = vadd.s32 %v946, %v950
      %v952 = vadd.s32 %v951, 536870912
      %v953 = vshrl.u32 %v952, 30
      %v954 = vshll.u32 %v953, 30
      %v955 = vsub.s32 %v951, %v954
      %vm956 = vcmp.lt.s32.totalorder %v955, 0
      %v957 = vsub.s32 0, %v955
      %v958 = vsel %vm956, %v957, %v955
      %v959 = vclz %v958
      %v960 = vsub.s32 %v959, 2
      %vm961 = vcmp.gt.s32.totalorder 0, %v960
      %v962 = vsel %vm961, 0, %v960
      %v963 = vsub.s32 32, %v962
      %v964 = vshll.u32 %v955, %v962
      %v965 = vshrl.u32 %v947, %v963
      %v966 = vor.u32 %v964, %v965
      %v967 = vsub.s32 4294967266, %v962
      %v968 = vadd.s32 %v967, 127
      %v969 = vshll.u32 %v968, 23
      %v970 = vor.u32 4788187, %v969
      %v971 = vand.u32 2147483647, %v970
      %v973 = vcvt.s32.f32 %v966
      %v974 = vmul.f32 %v973, %v971
      %v975 = vxor.u32 %v974, 2147483648
      %v976 = vsel %vm855, %v975, %v974
      %v977 = vsub.s32 4, %v953
      %v978 = vsel %vm855, %v977, %v953
      %v979 = vsel %vm854, %v80, %v976
      %v980 = vsel %vm854, 0, %v978
      %v981 = vmul.f32 %v979, %v979
      %v982 = vmul.f32 %v981, -0.001358992
      %v983 = vadd.f32 %v982, 0.041655596
      %v984 = vmul.f32 %v981, %v983
      %v985 = vadd.f32 %v984, -0.4999988
      %v986 = vmul.f32 %v981, %v985
      %v987 = vadd.f32 1.0, %v986
      %v988 = vmul.f32 %v979, %v979
      %v989 = vmul.f32 %v988, -0.00019511016
      %v990 = vadd.f32 %v989, 0.008332121
      %v991 = vmul.f32 %v988, %v990
      %v992 = vadd.f32 %v991, -0.16666654
      %v993 = vmul.f32 %v988, %v992
      %v994 = vadd.f32 %v993, 1.0
      %v995 = vmul.f32 %v994, %v979
      %vm996 = vweird.f32 %v80
      %v997 = vadd.s32 %v980, 3
      %v998 = vand.u32 %v997, 3
      %vm999 = vcmp.lt.s32.totalorder %v998, 2
      %vm1000 = vcmp.eq.s32.totalorder %v998, 0
      %v1001 = vxor.u32 %v995, 2147483648
      %v1002 = vsel %vm1000, %v987, %v1001
      %vm1003 = vcmp.eq.s32.totalorder %v998, 2
      %v1004 = vxor.u32 %v987, 2147483648
      %v1005 = vsel %vm1003, %v1004, %v995
      %v1006 = vsel %vm999, %v1002, %v1005
      %v1007 = vsel %vm996, nan, %v1006
      %v1008 = vmul.f32 %v234, %v852
      %v1009 = vsub.f32 0.0, %v389
      %v1010 = vmul.f32 %v1009, %v852
      %v1011 = vsub.f32 0.0, %v543
      %v1012 = vmul.f32 %v1011, %v1007
      %v1013 = vmul.f32 %v698, %v1007
      %v1014 = vmul.f32 %v543, %v1007
      %v1015 = vmul.f32 %v389, %v852
      %v1016 = vmul.f32 %v1010, 0.0
      %v1017 = vsub.f32 %v1008, %v1016
      %v1018 = vmul.f32 %v1008, 0.0
      %v1019 = vadd.f32 %v1018, %v1010
      %v1020 = vmul.f32 %v1012, 0.0
      %v1021 = vmul.f32 %v1013, 0.0
      %v1022 = vsub.f32 %v1020, %v1021
      %v1023 = vadd.f32 %v1020, %v1021
      %v1024 = vadd.f32 %v1017, %v1022
      %v1025 = vadd.f32 %v1019, %v1023
      %v1026 = vsub.f32 %v1018, %v1016
      %v1027 = vadd.f32 %v1018, %v1016
      %v1028 = vadd.f32 %v1026, %v1022
      %v1029 = vadd.f32 %v1027, %v1023
      %v1030 = vsub.f32 %v1014, %v1021
      %v1031 = vmul.f32 %v1014, 0.0
      %v1032 = vadd.f32 %v1031, %v1013
      %v1033 = vmul.f32 %v1015, 0.0
      %v1034 = vsub.f32 %v1018, %v1033
      %v1035 = vadd.f32 %v1018, %v1033
      %v1036 = vadd.f32 %v1030, %v1034
      %v1037 = vadd.f32 %v1032, %v1035
      %v1038 = vsub.f32 %v1031, %v1021
      %v1039 = vadd.f32 %v1031, %v1021
      %v1040 = vadd.f32 %v1038, %v1034
      %v1041 = vadd.f32 %v1039, %v1035
      %v1042 = vsub.f32 0.0, %v1010
      %v1043 = vsub.f32 0.0, %v1013
      %v1044 = vmul.f32 %v1024, %v1008
      %v1045 = vmul.f32 %v1025, %v1042
      %v1046 = vsub.f32 %v1044, %v1045
      %v1047 = vmul.f32 %v1024, %v1042
      %v1048 = vmul.f32 %v1025, %v1008
      %v1049 = vadd.f32 %v1047, %v1048
      %v1050 = vmul.f32 %v1028, %v1012
      %v1051 = vmul.f32 %v1029, %v1043
      %v1052 = vsub.f32 %v1050, %v1051
      %v1053 = vmul.f32 %v1028, %v1043
      %v1054 = vmul.f32 %v1029, %v1012
      %v1055 = vadd.f32 %v1053, %v1054
      %v1056 = vadd.f32 %v1046, %v1052
      %v1057 = vadd.f32 %v1049, %v1055
      %v1058 = vsub.f32 0.0, %v1015
      %v1059 = vmul.f32 %v1024, %v1014
      %v1060 = vmul.f32 %v1025, %v1043
      %v1061 = vsub.f32 %v1059, %v1060
      %v1062 = vmul.f32 %v1024, %v1043
      %v1063 = vmul.f32 %v1025, %v1014
      %v1064 = vadd.f32 %v1062, %v1063
      %v1065 = vmul.f32 %v1028, %v1008
      %v1066 = vmul.f32 %v1029, %v1058
      %v1067 = vsub.f32 %v1065, %v1066
      %v1068 = vmul.f32 %v1028, %v1058
      %v1069 = vmul.f32 %v1029, %v1008
      %v1070 = vadd.f32 %v1068, %v1069
      %v1071 = vadd.f32 %v1061, %v1067
      %v1072 = vadd.f32 %v1064, %v1070
      %v1073 = vmul.f32 %v1036, %v1008
      %v1074 = vmul.f32 %v1037, %v1042
      %v1075 = vsub.f32 %v1073, %v1074
      %v1076 = vmul.f32 %v1036, %v1042
      %v1077 = vmul.f32 %v1037, %v1008
      %v1078 = vadd.f32 %v1076, %v1077
      %v1079 = vmul.f32 %v1040, %v1012
      %v1080 = vmul.f32 %v1041, %v1043
      %v1081 = vsub.f32 %v1079, %v1080
      %v1082 = vmul.f32 %v1040, %v1043
      %v1083 = vmul.f32 %v1041, %v1012
      %v1084 = vadd.f32 %v1082, %v1083
      %v1085 = vadd.f32 %v1075, %v1081
      %v1086 = vadd.f32 %v1078, %v1084
      %v1087 = vmul.f32 %v1036, %v1014
      %v1088 = vmul.f32 %v1037, %v1043
      %v1089 = vsub.f32 %v1087, %v1088
      %v1090 = vmul.f32 %v1036, %v1043
      %v1091 = vmul.f32 %v1037, %v1014
      %v1092 = vadd.f32 %v1090, %v1091
      %v1093 = vmul.f32 %v1040, %v1008
      %v1094 = vmul.f32 %v1041, %v1058
      %v1095 = vsub.f32 %v1093, %v1094
      %v1096 = vmul.f32 %v1040, %v1058
      %v1097 = vmul.f32 %v1041, %v1008
      %v1098 = vadd.f32 %v1096, %v1097
      %v1099 = vadd.f32 %v1089, %v1095
      %v1100 = vadd.f32 %v1092, %v1098
      %s1101 = sld [smem:[#allocation2 + $0xc]]
      %v1102 = vstv %s1101
      %v1103 = vmul.f32 %v1102, %v32
      %s1104 = sld [smem:[#allocation2 + $0xd]]
      %v1105 = vstv %s1104
      %v1106 = vmul.f32 %v1105, %v35
      %v1107 = vadd.f32 %v1103, %v1106
      %s1108 = sld [smem:[#allocation2 + $0xe]]
      %v1109 = vstv %s1108
      %v1110 = vmul.f32 %v1109, %v38
      %v1111 = vadd.f32 %v1107, %v1110
      %s1112 = sld [smem:[#allocation2 + $0xf]]
      %v1113 = vstv %s1112
      %v1114 = vadd.f32 %v1111, %v1113
      %s1115 = sld [smem:[#allocation2 + $0x10]]
      %v1116 = vstv %s1115
      %v1117 = vmul.f32 %v1116, %v32
      %s1118 = sld [smem:[#allocation2 + $0x11]]
      %v1119 = vstv %s1118
      %v1120 = vmul.f32 %v1119, %v35
      %v1121 = vadd.f32 %v1117, %v1120
      %s1122 = sld [smem:[#allocation2 + $0x12]]
      %v1123 = vstv %s1122
      %v1124 = vmul.f32 %v1123, %v38
      %v1125 = vadd.f32 %v1121, %v1124
      %s1126 = sld [smem:[#allocation2 + $0x13]]
      %v1127 = vstv %s1126
      %v1128 = vadd.f32 %v1125, %v1127
      %s1129 = sld [smem:[#allocation2 + $0x14]]
      %v1130 = vstv %s1129
      %v1131 = vmul.f32 %v1130, %v32
      %s1132 = sld [smem:[#allocation2 + $0x15]]
      %v1133 = vstv %s1132
      %v1134 = vmul.f32 %v1133, %v35
      %v1135 = vadd.f32 %v1131, %v1134
      %s1136 = sld [smem:[#allocation2 + $0x16]]
      %v1137 = vstv %s1136
      %v1138 = vmul.f32 %v1137, %v38
      %v1139 = vadd.f32 %v1135, %v1138
      %s1140 = sld [smem:[#allocation2 + $0x17]]
      %v1141 = vstv %s1140
      %v1142 = vadd.f32 %v1139, %v1141
      %v1143 = vand.u32 2147483647, %v1114
      %vm1144 = vcmp.le.f32.partialorder %v1143, 0.7853982
      %vm1145 = vcmp.lt.s32.totalorder %v1114, 0
      %v1146 = vand.u32 %v1114, 2139095040
      %v1147 = vshrl.u32 %v1146, 23
      %v1148 = vsub.s32 %v1147, 127
      %v1149 = vand.u32 2147483647, %v1114
      %v1150 = vand.u32 %v1149, 8388607
      %v1151 = vor.u32 %v1150, 8388608
      %v1152 = vsub.s32 0, %v1151
      %v1153 = vadd.s32 %v1148, 1
      %vm1154 = vcmp.gt.s32.totalorder %v1153, 0
      %v1155 = vsel %vm1154, %v1153, 0
      %v1156 = vshrl.u32 %v1155, 5
      %v1157 = vand.u32 %v1155, 31
      %v1158 = vsub.s32 32, %v1157
      %v1159 = vshrl.u32 683565275, %v1158
      %v1160 = vshll.u32 683565275, %v1157
      %v1161 = vshrl.u32 2475754826, %v1158
      %v1162 = vor.u32 %v1160, %v1161
      %v1163 = vshll.u32 2475754826, %v1157
      %v1164 = vshrl.u32 2131351028, %v1158
      %v1165 = vor.u32 %v1163, %v1164
      %v1166 = vshll.u32 2131351028, %v1157
      %v1167 = vshrl.u32 2102212464, %v1158
      %v1168 = vor.u32 %v1166, %v1167
      %v1169 = vshll.u32 2102212464, %v1157
      %v1170 = vshrl.u32 920167782, %v1158
      %v1171 = vor.u32 %v1169, %v1170
      %v1172 = vshll.u32 920167782, %v1157
      %v1173 = vshrl.u32 1326507024, %v1158
      %v1174 = vor.u32 %v1172, %v1173
      %vm1175 = vcmp.lt.s32.totalorder %v1156, 1
      %vm1176 = vcmp.lt.s32.totalorder %v1156, 2
      %vm1177 = vcmp.lt.s32.totalorder %v1156, 3
      %vm1178 = vcmp.lt.s32.totalorder %v1156, 4
      %v1179 = vsel %vm1175, %v1159, %v1162
      %v1180 = vsel %vm1178, %v1168, 2102212464
      %v1181 = vsel %vm1177, %v1165, %v1180
      %v1182 = vsel %vm1176, %v1179, %v1181
      %v1183 = vsel %vm1175, %v1162, %v1165
      %v1184 = vsel %vm1178, %v1171, 920167782
      %v1185 = vsel %vm1177, %v1168, %v1184
      %v1186 = vsel %vm1176, %v1183, %v1185
      %v1187 = vsel %vm1175, %v1165, %v1168
      %v1188 = vsel %vm1178, %v1174, 1326507024
      %v1189 = vsel %vm1177, %v1171, %v1188
      %v1190 = vsel %vm1176, %v1187, %v1189
      %v1191 = vshll.u32 %v1151, 8
      %v1192 = vand.u32 %v1191, 65535
      %v1193 = vshrl.u32 %v1191, 16
      %v1194 = vand.u32 %v1190, 65535
      %v1195 = vshrl.u32 %v1190, 16
      %v1196 = vmul.u32 %v1192, %v1194
      %v1197 = vmul.u32 %v1192, %v1195
      %v1198 = vmul.u32 %v1193, %v1194
      %v1199 = vmul.u32 %v1193, %v1195
      %v1200 = vshll.u32 %v1197, 16
      %v1201 = vshrl.u32 %v1197, 16
      %v1202 = vshll.u32 %v1198, 16
      %v1203 = vshrl.u32 %v1198, 16
      %vm1204 = vc.u32 %v1196, %v1200
      %v1205 = vsel %vm1204, 1, 0
      %v1206 = vadd.s32 %v1196, %v1200
      %v1207 = vadd.s32 %v1199, %v1205
      %vm1208 = vc.u32 %v1206, %v1202
      %v1209 = vsel %vm1208, 1, 0
      %v1210 = vadd.s32 %v1206, %v1202
      %v1211 = vadd.s32 %v1207, %v1209
      %v1212 = vadd.s32 %v1211, %v1201
      %v1213 = vadd.s32 %v1212, %v1203
      %v1214 = vand.u32 %v1191, 65535
      %v1215 = vshrl.u32 %v1191, 16
      %v1216 = vand.u32 %v1186, 65535
      %v1217 = vshrl.u32 %v1186, 16
      %v1218 = vmul.u32 %v1214, %v1216
      %v1219 = vmul.u32 %v1214, %v1217
      %v1220 = vmul.u32 %v1215, %v1216
      %v1221 = vmul.u32 %v1215, %v1217
      %v1222 = vshll.u32 %v1219, 16
      %v1223 = vshrl.u32 %v1219, 16
      %v1224 = vshll.u32 %v1220, 16
      %v1225 = vshrl.u32 %v1220, 16
      %vm1226 = vc.u32 %v1218, %v1222
      %v1227 = vsel %vm1226, 1, 0
      %v1228 = vadd.s32 %v1218, %v1222
      %v1229 = vadd.s32 %v1221, %v1227
      %vm1230 = vc.u32 %v1228, %v1224
      %v1231 = vsel %vm1230, 1, 0
      %v1232 = vadd.s32 %v1228, %v1224
      %v1233 = vadd.s32 %v1229, %v1231
      %v1234 = vadd.s32 %v1233, %v1223
      %v1235 = vadd.s32 %v1234, %v1225
      %v1236 = vmul.u32 %v1191, %v1182
      %v1237 = vadd.s32 %v1213, %v1232
      %vm1238 = vc.u32 %v1213, %v1232
      %v1239 = vadd.s32 %v1235, 1
      %v1240 = vsel %vm1238, %v1239, %v1235
      %v1241 = vadd.s32 %v1236, %v1240
      %v1242 = vadd.s32 %v1241, 536870912
      %v1243 = vshrl.u32 %v1242, 30
      %v1244 = vshll.u32 %v1243, 30
      %v1245 = vsub.s32 %v1241, %v1244
      %vm1246 = vcmp.lt.s32.totalorder %v1245, 0
      %v1247 = vsub.s32 0, %v1245
      %v1248 = vsel %vm1246, %v1247, %v1245
      %v1249 = vclz %v1248
      %v1250 = vsub.s32 %v1249, 2
      %vm1251 = vcmp.gt.s32.totalorder 0, %v1250
      %v1252 = vsel %vm1251, 0, %v1250
      %v1253 = vsub.s32 32, %v1252
      %v1254 = vshll.u32 %v1245, %v1252
      %v1255 = vshrl.u32 %v1237, %v1253
      %v1256 = vor.u32 %v1254, %v1255
      %v1257 = vsub.s32 4294967266, %v1252
      %v1258 = vadd.s32 %v1257, 127
      %v1259 = vshll.u32 %v1258, 23
      %v1260 = vor.u32 4788187, %v1259
      %v1261 = vand.u32 2147483647, %v1260
      %v1263 = vcvt.s32.f32 %v1256
      %v1264 = vmul.f32 %v1263, %v1261
      %v1265 = vxor.u32 %v1264, 2147483648
      %v1266 = vsel %vm1145, %v1265, %v1264
      %v1267 = vsub.s32 4, %v1243
      %v1268 = vsel %vm1145, %v1267, %v1243
      %v1269 = vsel %vm1144, %v1114, %v1266
      %v1270 = vsel %vm1144, 0, %v1268
      %v1271 = vmul.f32 %v1269, %v1269
      %v1272 = vmul.f32 %v1271, -0.001358992
      %v1273 = vadd.f32 %v1272, 0.041655596
      %v1274 = vmul.f32 %v1271, %v1273
      %v1275 = vadd.f32 %v1274, -0.4999988
      %v1276 = vmul.f32 %v1271, %v1275
      %v1277 = vadd.f32 1.0, %v1276
      %v1278 = vmul.f32 %v1269, %v1269
      %v1279 = vmul.f32 %v1278, -0.00019511016
      %v1280 = vadd.f32 %v1279, 0.008332121
      %v1281 = vmul.f32 %v1278, %v1280
      %v1282 = vadd.f32 %v1281, -0.16666654
      %v1283 = vmul.f32 %v1278, %v1282
      %v1284 = vadd.f32 %v1283, 1.0
      %v1285 = vmul.f32 %v1284, %v1269
      %vm1286 = vweird.f32 %v1114
      %v1287 = vand.u32 %v1270, 3
      %vm1288 = vcmp.lt.s32.totalorder %v1287, 2
      %vm1289 = vcmp.eq.s32.totalorder %v1287, 0
      %v1290 = vxor.u32 %v1285, 2147483648
      %v1291 = vsel %vm1289, %v1277, %v1290
      %vm1292 = vcmp.eq.s32.totalorder %v1287, 2
      %v1293 = vxor.u32 %v1277, 2147483648
      %v1294 = vsel %vm1292, %v1293, %v1285
      %v1295 = vsel %vm1288, %v1291, %v1294
      %v1296 = vsel %vm1286, nan, %v1295
      %v1297 = vand.u32 2147483647, %v1114
      %vm1298 = vcmp.le.f32.partialorder %v1297, 0.7853982
      %vm1299 = vcmp.lt.s32.totalorder %v1114, 0
      %v1300 = vand.u32 %v1114, 2139095040
      %v1301 = vshrl.u32 %v1300, 23
      %v1302 = vsub.s32 %v1301, 127
      %v1303 = vand.u32 2147483647, %v1114
      %v1304 = vand.u32 %v1303, 8388607
      %v1305 = vor.u32 %v1304, 8388608
      %v1306 = vsub.s32 0, %v1305
      %v1307 = vadd.s32 %v1302, 1
      %vm1308 = vcmp.gt.s32.totalorder %v1307, 0
      %v1309 = vsel %vm1308, %v1307, 0
      %v1310 = vshrl.u32 %v1309, 5
      %v1311 = vand.u32 %v1309, 31
      %v1312 = vsub.s32 32, %v1311
      %v1313 = vshrl.u32 683565275, %v1312
      %v1314 = vshll.u32 683565275, %v1311
      %v1315 = vshrl.u32 2475754826, %v1312
      %v1316 = vor.u32 %v1314, %v1315
      %v1317 = vshll.u32 2475754826, %v1311
      %v1318 = vshrl.u32 2131351028, %v1312
      %v1319 = vor.u32 %v1317, %v1318
      %v1320 = vshll.u32 2131351028, %v1311
      %v1321 = vshrl.u32 2102212464, %v1312
      %v1322 = vor.u32 %v1320, %v1321
      %v1323 = vshll.u32 2102212464, %v1311
      %v1324 = vshrl.u32 920167782, %v1312
      %v1325 = vor.u32 %v1323, %v1324
      %v1326 = vshll.u32 920167782, %v1311
      %v1327 = vshrl.u32 1326507024, %v1312
      %v1328 = vor.u32 %v1326, %v1327
      %vm1329 = vcmp.lt.s32.totalorder %v1310, 1
      %vm1330 = vcmp.lt.s32.totalorder %v1310, 2
      %vm1331 = vcmp.lt.s32.totalorder %v1310, 3
      %vm1332 = vcmp.lt.s32.totalorder %v1310, 4
      %v1333 = vsel %vm1329, %v1313, %v1316
      %v1334 = vsel %vm1332, %v1322, 2102212464
      %v1335 = vsel %vm1331, %v1319, %v1334
      %v1336 = vsel %vm1330, %v1333, %v1335
      %v1337 = vsel %vm1329, %v1316, %v1319
      %v1338 = vsel %vm1332, %v1325, 920167782
      %v1339 = vsel %vm1331, %v1322, %v1338
      %v1340 = vsel %vm1330, %v1337, %v1339
      %v1341 = vsel %vm1329, %v1319, %v1322
      %v1342 = vsel %vm1332, %v1328, 1326507024
      %v1343 = vsel %vm1331, %v1325, %v1342
      %v1344 = vsel %vm1330, %v1341, %v1343
      %v1345 = vshll.u32 %v1305, 8
      %v1346 = vand.u32 %v1345, 65535
      %v1347 = vshrl.u32 %v1345, 16
      %v1348 = vand.u32 %v1344, 65535
      %v1349 = vshrl.u32 %v1344, 16
      %v1350 = vmul.u32 %v1346, %v1348
      %v1351 = vmul.u32 %v1346, %v1349
      %v1352 = vmul.u32 %v1347, %v1348
      %v1353 = vmul.u32 %v1347, %v1349
      %v1354 = vshll.u32 %v1351, 16
      %v1355 = vshrl.u32 %v1351, 16
      %v1356 = vshll.u32 %v1352, 16
      %v1357 = vshrl.u32 %v1352, 16
      %vm1358 = vc.u32 %v1350, %v1354
      %v1359 = vsel %vm1358, 1, 0
      %v1360 = vadd.s32 %v1350, %v1354
      %v1361 = vadd.s32 %v1353, %v1359
      %vm1362 = vc.u32 %v1360, %v1356
      %v1363 = vsel %vm1362, 1, 0
      %v1364 = vadd.s32 %v1360, %v1356
      %v1365 = vadd.s32 %v1361, %v1363
      %v1366 = vadd.s32 %v1365, %v1355
      %v1367 = vadd.s32 %v1366, %v1357
      %v1368 = vand.u32 %v1345, 65535
      %v1369 = vshrl.u32 %v1345, 16
      %v1370 = vand.u32 %v1340, 65535
      %v1371 = vshrl.u32 %v1340, 16
      %v1372 = vmul.u32 %v1368, %v1370
      %v1373 = vmul.u32 %v1368, %v1371
      %v1374 = vmul.u32 %v1369, %v1370
      %v1375 = vmul.u32 %v1369, %v1371
      %v1376 = vshll.u32 %v1373, 16
      %v1377 = vshrl.u32 %v1373, 16
      %v1378 = vshll.u32 %v1374, 16
      %v1379 = vshrl.u32 %v1374, 16
      %vm1380 = vc.u32 %v1372, %v1376
      %v1381 = vsel %vm1380, 1, 0
      %v1382 = vadd.s32 %v1372, %v1376
      %v1383 = vadd.s32 %v1375, %v1381
      %vm1384 = vc.u32 %v1382, %v1378
      %v1385 = vsel %vm1384, 1, 0
      %v1386 = vadd.s32 %v1382, %v1378
      %v1387 = vadd.s32 %v1383, %v1385
      %v1388 = vadd.s32 %v1387, %v1377
      %v1389 = vadd.s32 %v1388, %v1379
      %v1390 = vmul.u32 %v1345, %v1336
      %v1391 = vadd.s32 %v1367, %v1386
      %vm1392 = vc.u32 %v1367, %v1386
      %v1393 = vadd.s32 %v1389, 1
      %v1394 = vsel %vm1392, %v1393, %v1389
      %v1395 = vadd.s32 %v1390, %v1394
      %v1396 = vadd.s32 %v1395, 536870912
      %v1397 = vshrl.u32 %v1396, 30
      %v1398 = vshll.u32 %v1397, 30
      %v1399 = vsub.s32 %v1395, %v1398
      %vm1400 = vcmp.lt.s32.totalorder %v1399, 0
      %v1401 = vsub.s32 0, %v1399
      %v1402 = vsel %vm1400, %v1401, %v1399
      %v1403 = vclz %v1402
      %v1404 = vsub.s32 %v1403, 2
      %vm1405 = vcmp.gt.s32.totalorder 0, %v1404
      %v1406 = vsel %vm1405, 0, %v1404
      %v1407 = vsub.s32 32, %v1406
      %v1408 = vshll.u32 %v1399, %v1406
      %v1409 = vshrl.u32 %v1391, %v1407
      %v1410 = vor.u32 %v1408, %v1409
      %v1411 = vsub.s32 4294967266, %v1406
      %v1412 = vadd.s32 %v1411, 127
      %v1413 = vshll.u32 %v1412, 23
      %v1414 = vor.u32 4788187, %v1413
      %v1415 = vand.u32 2147483647, %v1414
      %v1417 = vcvt.s32.f32 %v1410
      %v1418 = vmul.f32 %v1417, %v1415
      %v1419 = vxor.u32 %v1418, 2147483648
      %v1420 = vsel %vm1299, %v1419, %v1418
      %v1421 = vsub.s32 4, %v1397
      %v1422 = vsel %vm1299, %v1421, %v1397
      %v1423 = vsel %vm1298, %v1114, %v1420
      %v1424 = vsel %vm1298, 0, %v1422
      %v1425 = vmul.f32 %v1423, %v1423
      %v1426 = vmul.f32 %v1425, -0.001358992
      %v1427 = vadd.f32 %v1426, 0.041655596
      %v1428 = vmul.f32 %v1425, %v1427
      %v1429 = vadd.f32 %v1428, -0.4999988
      %v1430 = vmul.f32 %v1425, %v1429
      %v1431 = vadd.f32 1.0, %v1430
      %v1432 = vmul.f32 %v1423, %v1423
      %v1433 = vmul.f32 %v1432, -0.00019511016
      %v1434 = vadd.f32 %v1433, 0.008332121
      %v1435 = vmul.f32 %v1432, %v1434
      %v1436 = vadd.f32 %v1435, -0.16666654
      %v1437 = vmul.f32 %v1432, %v1436
      %v1438 = vadd.f32 %v1437, 1.0
      %v1439 = vmul.f32 %v1438, %v1423
      %vm1440 = vweird.f32 %v1114
      %v1441 = vadd.s32 %v1424, 3
      %v1442 = vand.u32 %v1441, 3
      %vm1443 = vcmp.lt.s32.totalorder %v1442, 2
      %vm1444 = vcmp.eq.s32.totalorder %v1442, 0
      %v1445 = vxor.u32 %v1439, 2147483648
      %v1446 = vsel %vm1444, %v1431, %v1445
      %vm1447 = vcmp.eq.s32.totalorder %v1442, 2
      %v1448 = vxor.u32 %v1431, 2147483648
      %v1449 = vsel %vm1447, %v1448, %v1439
      %v1450 = vsel %vm1443, %v1446, %v1449
      %v1451 = vsel %vm1440, nan, %v1450
      %v1452 = vand.u32 2147483647, %v1128
      %vm1453 = vcmp.le.f32.partialorder %v1452, 0.7853982
      %vm1454 = vcmp.lt.s32.totalorder %v1128, 0
      %v1455 = vand.u32 %v1128, 2139095040
      %v1456 = vshrl.u32 %v1455, 23
      %v1457 = vsub.s32 %v1456, 127
      %v1458 = vand.u32 2147483647, %v1128
      %v1459 = vand.u32 %v1458, 8388607
      %v1460 = vor.u32 %v1459, 8388608
      %v1461 = vsub.s32 0, %v1460
      %v1462 = vadd.s32 %v1457, 1
      %vm1463 = vcmp.gt.s32.totalorder %v1462, 0
      %v1464 = vsel %vm1463, %v1462, 0
      %v1465 = vshrl.u32 %v1464, 5
      %v1466 = vand.u32 %v1464, 31
      %v1467 = vsub.s32 32, %v1466
      %v1468 = vshrl.u32 683565275, %v1467
      %v1469 = vshll.u32 683565275, %v1466
      %v1470 = vshrl.u32 2475754826, %v1467
      %v1471 = vor.u32 %v1469, %v1470
      %v1472 = vshll.u32 2475754826, %v1466
      %v1473 = vshrl.u32 2131351028, %v1467
      %v1474 = vor.u32 %v1472, %v1473
      %v1475 = vshll.u32 2131351028, %v1466
      %v1476 = vshrl.u32 2102212464, %v1467
      %v1477 = vor.u32 %v1475, %v1476
      %v1478 = vshll.u32 2102212464, %v1466
      %v1479 = vshrl.u32 920167782, %v1467
      %v1480 = vor.u32 %v1478, %v1479
      %v1481 = vshll.u32 920167782, %v1466
      %v1482 = vshrl.u32 1326507024, %v1467
      %v1483 = vor.u32 %v1481, %v1482
      %vm1484 = vcmp.lt.s32.totalorder %v1465, 1
      %vm1485 = vcmp.lt.s32.totalorder %v1465, 2
      %vm1486 = vcmp.lt.s32.totalorder %v1465, 3
      %vm1487 = vcmp.lt.s32.totalorder %v1465, 4
      %v1488 = vsel %vm1484, %v1468, %v1471
      %v1489 = vsel %vm1487, %v1477, 2102212464
      %v1490 = vsel %vm1486, %v1474, %v1489
      %v1491 = vsel %vm1485, %v1488, %v1490
      %v1492 = vsel %vm1484, %v1471, %v1474
      %v1493 = vsel %vm1487, %v1480, 920167782
      %v1494 = vsel %vm1486, %v1477, %v1493
      %v1495 = vsel %vm1485, %v1492, %v1494
      %v1496 = vsel %vm1484, %v1474, %v1477
      %v1497 = vsel %vm1487, %v1483, 1326507024
      %v1498 = vsel %vm1486, %v1480, %v1497
      %v1499 = vsel %vm1485, %v1496, %v1498
      %v1500 = vshll.u32 %v1460, 8
      %v1501 = vand.u32 %v1500, 65535
      %v1502 = vshrl.u32 %v1500, 16
      %v1503 = vand.u32 %v1499, 65535
      %v1504 = vshrl.u32 %v1499, 16
      %v1505 = vmul.u32 %v1501, %v1503
      %v1506 = vmul.u32 %v1501, %v1504
      %v1507 = vmul.u32 %v1502, %v1503
      %v1508 = vmul.u32 %v1502, %v1504
      %v1509 = vshll.u32 %v1506, 16
      %v1510 = vshrl.u32 %v1506, 16
      %v1511 = vshll.u32 %v1507, 16
      %v1512 = vshrl.u32 %v1507, 16
      %vm1513 = vc.u32 %v1505, %v1509
      %v1514 = vsel %vm1513, 1, 0
      %v1515 = vadd.s32 %v1505, %v1509
      %v1516 = vadd.s32 %v1508, %v1514
      %vm1517 = vc.u32 %v1515, %v1511
      %v1518 = vsel %vm1517, 1, 0
      %v1519 = vadd.s32 %v1515, %v1511
      %v1520 = vadd.s32 %v1516, %v1518
      %v1521 = vadd.s32 %v1520, %v1510
      %v1522 = vadd.s32 %v1521, %v1512
      %v1523 = vand.u32 %v1500, 65535
      %v1524 = vshrl.u32 %v1500, 16
      %v1525 = vand.u32 %v1495, 65535
      %v1526 = vshrl.u32 %v1495, 16
      %v1527 = vmul.u32 %v1523, %v1525
      %v1528 = vmul.u32 %v1523, %v1526
      %v1529 = vmul.u32 %v1524, %v1525
      %v1530 = vmul.u32 %v1524, %v1526
      %v1531 = vshll.u32 %v1528, 16
      %v1532 = vshrl.u32 %v1528, 16
      %v1533 = vshll.u32 %v1529, 16
      %v1534 = vshrl.u32 %v1529, 16
      %vm1535 = vc.u32 %v1527, %v1531
      %v1536 = vsel %vm1535, 1, 0
      %v1537 = vadd.s32 %v1527, %v1531
      %v1538 = vadd.s32 %v1530, %v1536
      %vm1539 = vc.u32 %v1537, %v1533
      %v1540 = vsel %vm1539, 1, 0
      %v1541 = vadd.s32 %v1537, %v1533
      %v1542 = vadd.s32 %v1538, %v1540
      %v1543 = vadd.s32 %v1542, %v1532
      %v1544 = vadd.s32 %v1543, %v1534
      %v1545 = vmul.u32 %v1500, %v1491
      %v1546 = vadd.s32 %v1522, %v1541
      %vm1547 = vc.u32 %v1522, %v1541
      %v1548 = vadd.s32 %v1544, 1
      %v1549 = vsel %vm1547, %v1548, %v1544
      %v1550 = vadd.s32 %v1545, %v1549
      %v1551 = vadd.s32 %v1550, 536870912
      %v1552 = vshrl.u32 %v1551, 30
      %v1553 = vshll.u32 %v1552, 30
      %v1554 = vsub.s32 %v1550, %v1553
      %vm1555 = vcmp.lt.s32.totalorder %v1554, 0
      %v1556 = vsub.s32 0, %v1554
      %v1557 = vsel %vm1555, %v1556, %v1554
      %v1558 = vclz %v1557
      %v1559 = vsub.s32 %v1558, 2
      %vm1560 = vcmp.gt.s32.totalorder 0, %v1559
      %v1561 = vsel %vm1560, 0, %v1559
      %v1562 = vsub.s32 32, %v1561
      %v1563 = vshll.u32 %v1554, %v1561
      %v1564 = vshrl.u32 %v1546, %v1562
      %v1565 = vor.u32 %v1563, %v1564
      %v1566 = vsub.s32 4294967266, %v1561
      %v1567 = vadd.s32 %v1566, 127
      %v1568 = vshll.u32 %v1567, 23
      %v1569 = vor.u32 4788187, %v1568
      %v1570 = vand.u32 2147483647, %v1569
      %v1572 = vcvt.s32.f32 %v1565
      %v1573 = vmul.f32 %v1572, %v1570
      %v1574 = vxor.u32 %v1573, 2147483648
      %v1575 = vsel %vm1454, %v1574, %v1573
      %v1576 = vsub.s32 4, %v1552
      %v1577 = vsel %vm1454, %v1576, %v1552
      %v1578 = vsel %vm1453, %v1128, %v1575
      %v1579 = vsel %vm1453, 0, %v1577
      %v1580 = vmul.f32 %v1578, %v1578
      %v1581 = vmul.f32 %v1580, -0.001358992
      %v1582 = vadd.f32 %v1581, 0.041655596
      %v1583 = vmul.f32 %v1580, %v1582
      %v1584 = vadd.f32 %v1583, -0.4999988
      %v1585 = vmul.f32 %v1580, %v1584
      %v1586 = vadd.f32 1.0, %v1585
      %v1587 = vmul.f32 %v1578, %v1578
      %v1588 = vmul.f32 %v1587, -0.00019511016
      %v1589 = vadd.f32 %v1588, 0.008332121
      %v1590 = vmul.f32 %v1587, %v1589
      %v1591 = vadd.f32 %v1590, -0.16666654
      %v1592 = vmul.f32 %v1587, %v1591
      %v1593 = vadd.f32 %v1592, 1.0
      %v1594 = vmul.f32 %v1593, %v1578
      %vm1595 = vweird.f32 %v1128
      %v1596 = vand.u32 %v1579, 3
      %vm1597 = vcmp.lt.s32.totalorder %v1596, 2
      %vm1598 = vcmp.eq.s32.totalorder %v1596, 0
      %v1599 = vxor.u32 %v1594, 2147483648
      %v1600 = vsel %vm1598, %v1586, %v1599
      %vm1601 = vcmp.eq.s32.totalorder %v1596, 2
      %v1602 = vxor.u32 %v1586, 2147483648
      %v1603 = vsel %vm1601, %v1602, %v1594
      %v1604 = vsel %vm1597, %v1600, %v1603
      %v1605 = vsel %vm1595, nan, %v1604
      %v1606 = vand.u32 2147483647, %v1128
      %vm1607 = vcmp.le.f32.partialorder %v1606, 0.7853982
      %vm1608 = vcmp.lt.s32.totalorder %v1128, 0
      %v1609 = vand.u32 %v1128, 2139095040
      %v1610 = vshrl.u32 %v1609, 23
      %v1611 = vsub.s32 %v1610, 127
      %v1612 = vand.u32 2147483647, %v1128
      %v1613 = vand.u32 %v1612, 8388607
      %v1614 = vor.u32 %v1613, 8388608
      %v1615 = vsub.s32 0, %v1614
      %v1616 = vadd.s32 %v1611, 1
      %vm1617 = vcmp.gt.s32.totalorder %v1616, 0
      %v1618 = vsel %vm1617, %v1616, 0
      %v1619 = vshrl.u32 %v1618, 5
      %v1620 = vand.u32 %v1618, 31
      %v1621 = vsub.s32 32, %v1620
      %v1622 = vshrl.u32 683565275, %v1621
      %v1623 = vshll.u32 683565275, %v1620
      %v1624 = vshrl.u32 2475754826, %v1621
      %v1625 = vor.u32 %v1623, %v1624
      %v1626 = vshll.u32 2475754826, %v1620
      %v1627 = vshrl.u32 2131351028, %v1621
      %v1628 = vor.u32 %v1626, %v1627
      %v1629 = vshll.u32 2131351028, %v1620
      %v1630 = vshrl.u32 2102212464, %v1621
      %v1631 = vor.u32 %v1629, %v1630
      %v1632 = vshll.u32 2102212464, %v1620
      %v1633 = vshrl.u32 920167782, %v1621
      %v1634 = vor.u32 %v1632, %v1633
      %v1635 = vshll.u32 920167782, %v1620
      %v1636 = vshrl.u32 1326507024, %v1621
      %v1637 = vor.u32 %v1635, %v1636
      %vm1638 = vcmp.lt.s32.totalorder %v1619, 1
      %vm1639 = vcmp.lt.s32.totalorder %v1619, 2
      %vm1640 = vcmp.lt.s32.totalorder %v1619, 3
      %vm1641 = vcmp.lt.s32.totalorder %v1619, 4
      %v1642 = vsel %vm1638, %v1622, %v1625
      %v1643 = vsel %vm1641, %v1631, 2102212464
      %v1644 = vsel %vm1640, %v1628, %v1643
      %v1645 = vsel %vm1639, %v1642, %v1644
      %v1646 = vsel %vm1638, %v1625, %v1628
      %v1647 = vsel %vm1641, %v1634, 920167782
      %v1648 = vsel %vm1640, %v1631, %v1647
      %v1649 = vsel %vm1639, %v1646, %v1648
      %v1650 = vsel %vm1638, %v1628, %v1631
      %v1651 = vsel %vm1641, %v1637, 1326507024
      %v1652 = vsel %vm1640, %v1634, %v1651
      %v1653 = vsel %vm1639, %v1650, %v1652
      %v1654 = vshll.u32 %v1614, 8
      %v1655 = vand.u32 %v1654, 65535
      %v1656 = vshrl.u32 %v1654, 16
      %v1657 = vand.u32 %v1653, 65535
      %v1658 = vshrl.u32 %v1653, 16
      %v1659 = vmul.u32 %v1655, %v1657
      %v1660 = vmul.u32 %v1655, %v1658
      %v1661 = vmul.u32 %v1656, %v1657
      %v1662 = vmul.u32 %v1656, %v1658
      %v1663 = vshll.u32 %v1660, 16
      %v1664 = vshrl.u32 %v1660, 16
      %v1665 = vshll.u32 %v1661, 16
      %v1666 = vshrl.u32 %v1661, 16
      %vm1667 = vc.u32 %v1659, %v1663
      %v1668 = vsel %vm1667, 1, 0
      %v1669 = vadd.s32 %v1659, %v1663
      %v1670 = vadd.s32 %v1662, %v1668
      %vm1671 = vc.u32 %v1669, %v1665
      %v1672 = vsel %vm1671, 1, 0
      %v1673 = vadd.s32 %v1669, %v1665
      %v1674 = vadd.s32 %v1670, %v1672
      %v1675 = vadd.s32 %v1674, %v1664
      %v1676 = vadd.s32 %v1675, %v1666
      %v1677 = vand.u32 %v1654, 65535
      %v1678 = vshrl.u32 %v1654, 16
      %v1679 = vand.u32 %v1649, 65535
      %v1680 = vshrl.u32 %v1649, 16
      %v1681 = vmul.u32 %v1677, %v1679
      %v1682 = vmul.u32 %v1677, %v1680
      %v1683 = vmul.u32 %v1678, %v1679
      %v1684 = vmul.u32 %v1678, %v1680
      %v1685 = vshll.u32 %v1682, 16
      %v1686 = vshrl.u32 %v1682, 16
      %v1687 = vshll.u32 %v1683, 16
      %v1688 = vshrl.u32 %v1683, 16
      %vm1689 = vc.u32 %v1681, %v1685
      %v1690 = vsel %vm1689, 1, 0
      %v1691 = vadd.s32 %v1681, %v1685
      %v1692 = vadd.s32 %v1684, %v1690
      %vm1693 = vc.u32 %v1691, %v1687
      %v1694 = vsel %vm1693, 1, 0
      %v1695 = vadd.s32 %v1691, %v1687
      %v1696 = vadd.s32 %v1692, %v1694
      %v1697 = vadd.s32 %v1696, %v1686
      %v1698 = vadd.s32 %v1697, %v1688
      %v1699 = vmul.u32 %v1654, %v1645
      %v1700 = vadd.s32 %v1676, %v1695
      %vm1701 = vc.u32 %v1676, %v1695
      %v1702 = vadd.s32 %v1698, 1
      %v1703 = vsel %vm1701, %v1702, %v1698
      %v1704 = vadd.s32 %v1699, %v1703
      %v1705 = vadd.s32 %v1704, 536870912
      %v1706 = vshrl.u32 %v1705, 30
      %v1707 = vshll.u32 %v1706, 30
      %v1708 = vsub.s32 %v1704, %v1707
      %vm1709 = vcmp.lt.s32.totalorder %v1708, 0
      %v1710 = vsub.s32 0, %v1708
      %v1711 = vsel %vm1709, %v1710, %v1708
      %v1712 = vclz %v1711
      %v1713 = vsub.s32 %v1712, 2
      %vm1714 = vcmp.gt.s32.totalorder 0, %v1713
      %v1715 = vsel %vm1714, 0, %v1713
      %v1716 = vsub.s32 32, %v1715
      %v1717 = vshll.u32 %v1708, %v1715
      %v1718 = vshrl.u32 %v1700, %v1716
      %v1719 = vor.u32 %v1717, %v1718
      %v1720 = vsub.s32 4294967266, %v1715
      %v1721 = vadd.s32 %v1720, 127
      %v1722 = vshll.u32 %v1721, 23
      %v1723 = vor.u32 4788187, %v1722
      %v1724 = vand.u32 2147483647, %v1723
      %v1726 = vcvt.s32.f32 %v1719
      %v1727 = vmul.f32 %v1726, %v1724
      %v1728 = vxor.u32 %v1727, 2147483648
      %v1729 = vsel %vm1608, %v1728, %v1727
      %v1730 = vsub.s32 4, %v1706
      %v1731 = vsel %vm1608, %v1730, %v1706
      %v1732 = vsel %vm1607, %v1128, %v1729
      %v1733 = vsel %vm1607, 0, %v1731
      %v1734 = vmul.f32 %v1732, %v1732
      %v1735 = vmul.f32 %v1734, -0.001358992
      %v1736 = vadd.f32 %v1735, 0.041655596
      %v1737 = vmul.f32 %v1734, %v1736
      %v1738 = vadd.f32 %v1737, -0.4999988
      %v1739 = vmul.f32 %v1734, %v1738
      %v1740 = vadd.f32 1.0, %v1739
      %v1741 = vmul.f32 %v1732, %v1732
      %v1742 = vmul.f32 %v1741, -0.00019511016
      %v1743 = vadd.f32 %v1742, 0.008332121
      %v1744 = vmul.f32 %v1741, %v1743
      %v1745 = vadd.f32 %v1744, -0.16666654
      %v1746 = vmul.f32 %v1741, %v1745
      %v1747 = vadd.f32 %v1746, 1.0
      %v1748 = vmul.f32 %v1747, %v1732
      %vm1749 = vweird.f32 %v1128
      %v1750 = vadd.s32 %v1733, 3
      %v1751 = vand.u32 %v1750, 3
      %vm1752 = vcmp.lt.s32.totalorder %v1751, 2
      %vm1753 = vcmp.eq.s32.totalorder %v1751, 0
      %v1754 = vxor.u32 %v1748, 2147483648
      %v1755 = vsel %vm1753, %v1740, %v1754
      %vm1756 = vcmp.eq.s32.totalorder %v1751, 2
      %v1757 = vxor.u32 %v1740, 2147483648
      %v1758 = vsel %vm1756, %v1757, %v1748
      %v1759 = vsel %vm1752, %v1755, %v1758
      %v1760 = vsel %vm1749, nan, %v1759
      %v1761 = vand.u32 2147483647, %v1142
      %vm1762 = vcmp.le.f32.partialorder %v1761, 0.7853982
      %vm1763 = vcmp.lt.s32.totalorder %v1142, 0
      %v1764 = vand.u32 %v1142, 2139095040
      %v1765 = vshrl.u32 %v1764, 23
      %v1766 = vsub.s32 %v1765, 127
      %v1767 = vand.u32 2147483647, %v1142
      %v1768 = vand.u32 %v1767, 8388607
      %v1769 = vor.u32 %v1768, 8388608
      %v1770 = vsub.s32 0, %v1769
      %v1771 = vadd.s32 %v1766, 1
      %vm1772 = vcmp.gt.s32.totalorder %v1771, 0
      %v1773 = vsel %vm1772, %v1771, 0
      %v1774 = vshrl.u32 %v1773, 5
      %v1775 = vand.u32 %v1773, 31
      %v1776 = vsub.s32 32, %v1775
      %v1777 = vshrl.u32 683565275, %v1776
      %v1778 = vshll.u32 683565275, %v1775
      %v1779 = vshrl.u32 2475754826, %v1776
      %v1780 = vor.u32 %v1778, %v1779
      %v1781 = vshll.u32 2475754826, %v1775
      %v1782 = vshrl.u32 2131351028, %v1776
      %v1783 = vor.u32 %v1781, %v1782
      %v1784 = vshll.u32 2131351028, %v1775
      %v1785 = vshrl.u32 2102212464, %v1776
      %v1786 = vor.u32 %v1784, %v1785
      %v1787 = vshll.u32 2102212464, %v1775
      %v1788 = vshrl.u32 920167782, %v1776
      %v1789 = vor.u32 %v1787, %v1788
      %v1790 = vshll.u32 920167782, %v1775
      %v1791 = vshrl.u32 1326507024, %v1776
      %v1792 = vor.u32 %v1790, %v1791
      %vm1793 = vcmp.lt.s32.totalorder %v1774, 1
      %vm1794 = vcmp.lt.s32.totalorder %v1774, 2
      %vm1795 = vcmp.lt.s32.totalorder %v1774, 3
      %vm1796 = vcmp.lt.s32.totalorder %v1774, 4
      %v1797 = vsel %vm1793, %v1777, %v1780
      %v1798 = vsel %vm1796, %v1786, 2102212464
      %v1799 = vsel %vm1795, %v1783, %v1798
      %v1800 = vsel %vm1794, %v1797, %v1799
      %v1801 = vsel %vm1793, %v1780, %v1783
      %v1802 = vsel %vm1796, %v1789, 920167782
      %v1803 = vsel %vm1795, %v1786, %v1802
      %v1804 = vsel %vm1794, %v1801, %v1803
      %v1805 = vsel %vm1793, %v1783, %v1786
      %v1806 = vsel %vm1796, %v1792, 1326507024
      %v1807 = vsel %vm1795, %v1789, %v1806
      %v1808 = vsel %vm1794, %v1805, %v1807
      %v1809 = vshll.u32 %v1769, 8
      %v1810 = vand.u32 %v1809, 65535
      %v1811 = vshrl.u32 %v1809, 16
      %v1812 = vand.u32 %v1808, 65535
      %v1813 = vshrl.u32 %v1808, 16
      %v1814 = vmul.u32 %v1810, %v1812
      %v1815 = vmul.u32 %v1810, %v1813
      %v1816 = vmul.u32 %v1811, %v1812
      %v1817 = vmul.u32 %v1811, %v1813
      %v1818 = vshll.u32 %v1815, 16
      %v1819 = vshrl.u32 %v1815, 16
      %v1820 = vshll.u32 %v1816, 16
      %v1821 = vshrl.u32 %v1816, 16
      %vm1822 = vc.u32 %v1814, %v1818
      %v1823 = vsel %vm1822, 1, 0
      %v1824 = vadd.s32 %v1814, %v1818
      %v1825 = vadd.s32 %v1817, %v1823
      %vm1826 = vc.u32 %v1824, %v1820
      %v1827 = vsel %vm1826, 1, 0
      %v1828 = vadd.s32 %v1824, %v1820
      %v1829 = vadd.s32 %v1825, %v1827
      %v1830 = vadd.s32 %v1829, %v1819
      %v1831 = vadd.s32 %v1830, %v1821
      %v1832 = vand.u32 %v1809, 65535
      %v1833 = vshrl.u32 %v1809, 16
      %v1834 = vand.u32 %v1804, 65535
      %v1835 = vshrl.u32 %v1804, 16
      %v1836 = vmul.u32 %v1832, %v1834
      %v1837 = vmul.u32 %v1832, %v1835
      %v1838 = vmul.u32 %v1833, %v1834
      %v1839 = vmul.u32 %v1833, %v1835
      %v1840 = vshll.u32 %v1837, 16
      %v1841 = vshrl.u32 %v1837, 16
      %v1842 = vshll.u32 %v1838, 16
      %v1843 = vshrl.u32 %v1838, 16
      %vm1844 = vc.u32 %v1836, %v1840
      %v1845 = vsel %vm1844, 1, 0
      %v1846 = vadd.s32 %v1836, %v1840
      %v1847 = vadd.s32 %v1839, %v1845
      %vm1848 = vc.u32 %v1846, %v1842
      %v1849 = vsel %vm1848, 1, 0
      %v1850 = vadd.s32 %v1846, %v1842
      %v1851 = vadd.s32 %v1847, %v1849
      %v1852 = vadd.s32 %v1851, %v1841
      %v1853 = vadd.s32 %v1852, %v1843
      %v1854 = vmul.u32 %v1809, %v1800
      %v1855 = vadd.s32 %v1831, %v1850
      %vm1856 = vc.u32 %v1831, %v1850
      %v1857 = vadd.s32 %v1853, 1
      %v1858 = vsel %vm1856, %v1857, %v1853
      %v1859 = vadd.s32 %v1854, %v1858
      %v1860 = vadd.s32 %v1859, 536870912
      %v1861 = vshrl.u32 %v1860, 30
      %v1862 = vshll.u32 %v1861, 30
      %v1863 = vsub.s32 %v1859, %v1862
      %vm1864 = vcmp.lt.s32.totalorder %v1863, 0
      %v1865 = vsub.s32 0, %v1863
      %v1866 = vsel %vm1864, %v1865, %v1863
      %v1867 = vclz %v1866
      %v1868 = vsub.s32 %v1867, 2
      %vm1869 = vcmp.gt.s32.totalorder 0, %v1868
      %v1870 = vsel %vm1869, 0, %v1868
      %v1871 = vsub.s32 32, %v1870
      %v1872 = vshll.u32 %v1863, %v1870
      %v1873 = vshrl.u32 %v1855, %v1871
      %v1874 = vor.u32 %v1872, %v1873
      %v1875 = vsub.s32 4294967266, %v1870
      %v1876 = vadd.s32 %v1875, 127
      %v1877 = vshll.u32 %v1876, 23
      %v1878 = vor.u32 4788187, %v1877
      %v1879 = vand.u32 2147483647, %v1878
      %v1881 = vcvt.s32.f32 %v1874
      %v1882 = vmul.f32 %v1881, %v1879
      %v1883 = vxor.u32 %v1882, 2147483648
      %v1884 = vsel %vm1763, %v1883, %v1882
      %v1885 = vsub.s32 4, %v1861
      %v1886 = vsel %vm1763, %v1885, %v1861
      %v1887 = vsel %vm1762, %v1142, %v1884
      %v1888 = vsel %vm1762, 0, %v1886
      %v1889 = vmul.f32 %v1887, %v1887
      %v1890 = vmul.f32 %v1889, -0.001358992
      %v1891 = vadd.f32 %v1890, 0.041655596
      %v1892 = vmul.f32 %v1889, %v1891
      %v1893 = vadd.f32 %v1892, -0.4999988
      %v1894 = vmul.f32 %v1889, %v1893
      %v1895 = vadd.f32 1.0, %v1894
      %v1896 = vmul.f32 %v1887, %v1887
      %v1897 = vmul.f32 %v1896, -0.00019511016
      %v1898 = vadd.f32 %v1897, 0.008332121
      %v1899 = vmul.f32 %v1896, %v1898
      %v1900 = vadd.f32 %v1899, -0.16666654
      %v1901 = vmul.f32 %v1896, %v1900
      %v1902 = vadd.f32 %v1901, 1.0
      %v1903 = vmul.f32 %v1902, %v1887
      %vm1904 = vweird.f32 %v1142
      %v1905 = vand.u32 %v1888, 3
      %vm1906 = vcmp.lt.s32.totalorder %v1905, 2
      %vm1907 = vcmp.eq.s32.totalorder %v1905, 0
      %v1908 = vxor.u32 %v1903, 2147483648
      %v1909 = vsel %vm1907, %v1895, %v1908
      %vm1910 = vcmp.eq.s32.totalorder %v1905, 2
      %v1911 = vxor.u32 %v1895, 2147483648
      %v1912 = vsel %vm1910, %v1911, %v1903
      %v1913 = vsel %vm1906, %v1909, %v1912
      %v1914 = vsel %vm1904, nan, %v1913
      %v1915 = vand.u32 2147483647, %v1142
      %vm1916 = vcmp.le.f32.partialorder %v1915, 0.7853982
      %vm1917 = vcmp.lt.s32.totalorder %v1142, 0
      %v1918 = vand.u32 %v1142, 2139095040
      %v1919 = vshrl.u32 %v1918, 23
      %v1920 = vsub.s32 %v1919, 127
      %v1921 = vand.u32 2147483647, %v1142
      %v1922 = vand.u32 %v1921, 8388607
      %v1923 = vor.u32 %v1922, 8388608
      %v1924 = vsub.s32 0, %v1923
      %v1925 = vadd.s32 %v1920, 1
      %vm1926 = vcmp.gt.s32.totalorder %v1925, 0
      %v1927 = vsel %vm1926, %v1925, 0
      %v1928 = vshrl.u32 %v1927, 5
      %v1929 = vand.u32 %v1927, 31
      %v1930 = vsub.s32 32, %v1929
      %v1931 = vshrl.u32 683565275, %v1930
      %v1932 = vshll.u32 683565275, %v1929
      %v1933 = vshrl.u32 2475754826, %v1930
      %v1934 = vor.u32 %v1932, %v1933
      %v1935 = vshll.u32 2475754826, %v1929
      %v1936 = vshrl.u32 2131351028, %v1930
      %v1937 = vor.u32 %v1935, %v1936
      %v1938 = vshll.u32 2131351028, %v1929
      %v1939 = vshrl.u32 2102212464, %v1930
      %v1940 = vor.u32 %v1938, %v1939
      %v1941 = vshll.u32 2102212464, %v1929
      %v1942 = vshrl.u32 920167782, %v1930
      %v1943 = vor.u32 %v1941, %v1942
      %v1944 = vshll.u32 920167782, %v1929
      %v1945 = vshrl.u32 1326507024, %v1930
      %v1946 = vor.u32 %v1944, %v1945
      %vm1947 = vcmp.lt.s32.totalorder %v1928, 1
      %vm1948 = vcmp.lt.s32.totalorder %v1928, 2
      %vm1949 = vcmp.lt.s32.totalorder %v1928, 3
      %vm1950 = vcmp.lt.s32.totalorder %v1928, 4
      %v1951 = vsel %vm1947, %v1931, %v1934
      %v1952 = vsel %vm1950, %v1940, 2102212464
      %v1953 = vsel %vm1949, %v1937, %v1952
      %v1954 = vsel %vm1948, %v1951, %v1953
      %v1955 = vsel %vm1947, %v1934, %v1937
      %v1956 = vsel %vm1950, %v1943, 920167782
      %v1957 = vsel %vm1949, %v1940, %v1956
      %v1958 = vsel %vm1948, %v1955, %v1957
      %v1959 = vsel %vm1947, %v1937, %v1940
      %v1960 = vsel %vm1950, %v1946, 1326507024
      %v1961 = vsel %vm1949, %v1943, %v1960
      %v1962 = vsel %vm1948, %v1959, %v1961
      %v1963 = vshll.u32 %v1923, 8
      %v1964 = vand.u32 %v1963, 65535
      %v1965 = vshrl.u32 %v1963, 16
      %v1966 = vand.u32 %v1962, 65535
      %v1967 = vshrl.u32 %v1962, 16
      %v1968 = vmul.u32 %v1964, %v1966
      %v1969 = vmul.u32 %v1964, %v1967
      %v1970 = vmul.u32 %v1965, %v1966
      %v1971 = vmul.u32 %v1965, %v1967
      %v1972 = vshll.u32 %v1969, 16
      %v1973 = vshrl.u32 %v1969, 16
      %v1974 = vshll.u32 %v1970, 16
      %v1975 = vshrl.u32 %v1970, 16
      %vm1976 = vc.u32 %v1968, %v1972
      %v1977 = vsel %vm1976, 1, 0
      %v1978 = vadd.s32 %v1968, %v1972
      %v1979 = vadd.s32 %v1971, %v1977
      %vm1980 = vc.u32 %v1978, %v1974
      %v1981 = vsel %vm1980, 1, 0
      %v1982 = vadd.s32 %v1978, %v1974
      %v1983 = vadd.s32 %v1979, %v1981
      %v1984 = vadd.s32 %v1983, %v1973
      %v1985 = vadd.s32 %v1984, %v1975
      %v1986 = vand.u32 %v1963, 65535
      %v1987 = vshrl.u32 %v1963, 16
      %v1988 = vand.u32 %v1958, 65535
      %v1989 = vshrl.u32 %v1958, 16
      %v1990 = vmul.u32 %v1986, %v1988
      %v1991 = vmul.u32 %v1986, %v1989
      %v1992 = vmul.u32 %v1987, %v1988
      %v1993 = vmul.u32 %v1987, %v1989
      %v1994 = vshll.u32 %v1991, 16
      %v1995 = vshrl.u32 %v1991, 16
      %v1996 = vshll.u32 %v1992, 16
      %v1997 = vshrl.u32 %v1992, 16
      %vm1998 = vc.u32 %v1990, %v1994
      %v1999 = vsel %vm1998, 1, 0
      %v2000 = vadd.s32 %v1990, %v1994
      %v2001 = vadd.s32 %v1993, %v1999
      %vm2002 = vc.u32 %v2000, %v1996
      %v2003 = vsel %vm2002, 1, 0
      %v2004 = vadd.s32 %v2000, %v1996
      %v2005 = vadd.s32 %v2001, %v2003
      %v2006 = vadd.s32 %v2005, %v1995
      %v2007 = vadd.s32 %v2006, %v1997
      %v2008 = vmul.u32 %v1963, %v1954
      %v2009 = vadd.s32 %v1985, %v2004
      %vm2010 = vc.u32 %v1985, %v2004
      %v2011 = vadd.s32 %v2007, 1
      %v2012 = vsel %vm2010, %v2011, %v2007
      %v2013 = vadd.s32 %v2008, %v2012
      %v2014 = vadd.s32 %v2013, 536870912
      %v2015 = vshrl.u32 %v2014, 30
      %v2016 = vshll.u32 %v2015, 30
      %v2017 = vsub.s32 %v2013, %v2016
      %vm2018 = vcmp.lt.s32.totalorder %v2017, 0
      %v2019 = vsub.s32 0, %v2017
      %v2020 = vsel %vm2018, %v2019, %v2017
      %v2021 = vclz %v2020
      %v2022 = vsub.s32 %v2021, 2
      %vm2023 = vcmp.gt.s32.totalorder 0, %v2022
      %v2024 = vsel %vm2023, 0, %v2022
      %v2025 = vsub.s32 32, %v2024
      %v2026 = vshll.u32 %v2017, %v2024
      %v2027 = vshrl.u32 %v2009, %v2025
      %v2028 = vor.u32 %v2026, %v2027
      %v2029 = vsub.s32 4294967266, %v2024
      %v2030 = vadd.s32 %v2029, 127
      %v2031 = vshll.u32 %v2030, 23
      %v2032 = vor.u32 4788187, %v2031
      %v2033 = vand.u32 2147483647, %v2032
      %v2035 = vcvt.s32.f32 %v2028
      %v2036 = vmul.f32 %v2035, %v2033
      %v2037 = vxor.u32 %v2036, 2147483648
      %v2038 = vsel %vm1917, %v2037, %v2036
      %v2039 = vsub.s32 4, %v2015
      %v2040 = vsel %vm1917, %v2039, %v2015
      %v2041 = vsel %vm1916, %v1142, %v2038
      %v2042 = vsel %vm1916, 0, %v2040
      %v2043 = vmul.f32 %v2041, %v2041
      %v2044 = vmul.f32 %v2043, -0.001358992
      %v2045 = vadd.f32 %v2044, 0.041655596
      %v2046 = vmul.f32 %v2043, %v2045
      %v2047 = vadd.f32 %v2046, -0.4999988
      %v2048 = vmul.f32 %v2043, %v2047
      %v2049 = vadd.f32 1.0, %v2048
      %v2050 = vmul.f32 %v2041, %v2041
      %v2051 = vmul.f32 %v2050, -0.00019511016
      %v2052 = vadd.f32 %v2051, 0.008332121
      %v2053 = vmul.f32 %v2050, %v2052
      %v2054 = vadd.f32 %v2053, -0.16666654
      %v2055 = vmul.f32 %v2050, %v2054
      %v2056 = vadd.f32 %v2055, 1.0
      %v2057 = vmul.f32 %v2056, %v2041
      %vm2058 = vweird.f32 %v1142
      %v2059 = vadd.s32 %v2042, 3
      %v2060 = vand.u32 %v2059, 3
      %vm2061 = vcmp.lt.s32.totalorder %v2060, 2
      %vm2062 = vcmp.eq.s32.totalorder %v2060, 0
      %v2063 = vxor.u32 %v2057, 2147483648
      %v2064 = vsel %vm2062, %v2049, %v2063
      %vm2065 = vcmp.eq.s32.totalorder %v2060, 2
      %v2066 = vxor.u32 %v2049, 2147483648
      %v2067 = vsel %vm2065, %v2066, %v2057
      %v2068 = vsel %vm2061, %v2064, %v2067
      %v2069 = vsel %vm2058, nan, %v2068
      %v2070 = vmul.f32 %v1296, %v1914
      %v2071 = vsub.f32 0.0, %v1451
      %v2072 = vmul.f32 %v2071, %v1914
      %v2073 = vsub.f32 0.0, %v1605
      %v2074 = vmul.f32 %v2073, %v2069
      %v2075 = vmul.f32 %v1760, %v2069
      %v2076 = vmul.f32 %v1605, %v2069
      %v2077 = vmul.f32 %v1451, %v1914
      %v2078 = vmul.f32 %v2070, %v1056
      %v2079 = vmul.f32 %v2072, %v1057
      %v2080 = vsub.f32 %v2078, %v2079
      %v2081 = vmul.f32 %v2070, %v1057
      %v2082 = vmul.f32 %v2072, %v1056
      %v2083 = vadd.f32 %v2081, %v2082
      %v2084 = vmul.f32 %v2074, %v1085
      %v2085 = vmul.f32 %v2075, %v1086
      %v2086 = vsub.f32 %v2084, %v2085
      %v2087 = vmul.f32 %v2074, %v1086
      %v2088 = vmul.f32 %v2075, %v1085
      %v2089 = vadd.f32 %v2087, %v2088
      %v2090 = vadd.f32 %v2080, %v2086
      %v2091 = vadd.f32 %v2083, %v2089
      %v2092 = vmul.f32 %v2070, %v1071
      %v2093 = vmul.f32 %v2072, %v1072
      %v2094 = vsub.f32 %v2092, %v2093
      %v2095 = vmul.f32 %v2070, %v1072
      %v2096 = vmul.f32 %v2072, %v1071
      %v2097 = vadd.f32 %v2095, %v2096
      %v2098 = vmul.f32 %v2074, %v1099
      %v2099 = vmul.f32 %v2075, %v1100
      %v2100 = vsub.f32 %v2098, %v2099
      %v2101 = vmul.f32 %v2074, %v1100
      %v2102 = vmul.f32 %v2075, %v1099
      %v2103 = vadd.f32 %v2101, %v2102
      %v2104 = vadd.f32 %v2094, %v2100
      %v2105 = vadd.f32 %v2097, %v2103
      %v2106 = vmul.f32 %v2076, %v1056
      %v2107 = vmul.f32 %v2075, %v1057
      %v2108 = vsub.f32 %v2106, %v2107
      %v2109 = vmul.f32 %v2076, %v1057
      %v2110 = vmul.f32 %v2075, %v1056
      %v2111 = vadd.f32 %v2109, %v2110
      %v2112 = vmul.f32 %v2070, %v1085
      %v2113 = vmul.f32 %v2077, %v1086
      %v2114 = vsub.f32 %v2112, %v2113
      %v2115 = vmul.f32 %v2070, %v1086
      %v2116 = vmul.f32 %v2077, %v1085
      %v2117 = vadd.f32 %v2115, %v2116
      %v2118 = vadd.f32 %v2108, %v2114
      %v2119 = vadd.f32 %v2111, %v2117
      %v2120 = vmul.f32 %v2076, %v1071
      %v2121 = vmul.f32 %v2075, %v1072
      %v2122 = vsub.f32 %v2120, %v2121
      %v2123 = vmul.f32 %v2076, %v1072
      %v2124 = vmul.f32 %v2075, %v1071
      %v2125 = vadd.f32 %v2123, %v2124
      %v2126 = vmul.f32 %v2070, %v1099
      %v2127 = vmul.f32 %v2077, %v1100
      %v2128 = vsub.f32 %v2126, %v2127
      %v2129 = vmul.f32 %v2070, %v1100
      %v2130 = vmul.f32 %v2077, %v1099
      %v2131 = vadd.f32 %v2129, %v2130
      %v2132 = vadd.f32 %v2122, %v2128
      %v2133 = vadd.f32 %v2125, %v2131
      %v2134 = vsub.f32 0.0, %v2072
      %v2135 = vsub.f32 0.0, %v2075
      %v2136 = vmul.f32 %v2090, %v2070
      %v2137 = vmul.f32 %v2091, %v2134
      %v2138 = vsub.f32 %v2136, %v2137
      %v2139 = vmul.f32 %v2090, %v2134
      %v2140 = vmul.f32 %v2091, %v2070
      %v2141 = vadd.f32 %v2139, %v2140
      %v2142 = vmul.f32 %v2104, %v2074
      %v2143 = vmul.f32 %v2105, %v2135
      %v2144 = vsub.f32 %v2142, %v2143
      %v2145 = vmul.f32 %v2104, %v2135
      %v2146 = vmul.f32 %v2105, %v2074
      %v2147 = vadd.f32 %v2145, %v2146
      %v2148 = vadd.f32 %v2138, %v2144
      %v2149 = vadd.f32 %v2141, %v2147
      %v2150 = vsub.f32 0.0, %v2077
      %v2151 = vmul.f32 %v2090, %v2076
      %v2152 = vmul.f32 %v2091, %v2135
      %v2153 = vsub.f32 %v2151, %v2152
      %v2154 = vmul.f32 %v2090, %v2135
      %v2155 = vmul.f32 %v2091, %v2076
      %v2156 = vadd.f32 %v2154, %v2155
      %v2157 = vmul.f32 %v2104, %v2070
      %v2158 = vmul.f32 %v2105, %v2150
      %v2159 = vsub.f32 %v2157, %v2158
      %v2160 = vmul.f32 %v2104, %v2150
      %v2161 = vmul.f32 %v2105, %v2070
      %v2162 = vadd.f32 %v2160, %v2161
      %v2163 = vadd.f32 %v2153, %v2159
      %v2164 = vadd.f32 %v2156, %v2162
      %v2165 = vmul.f32 %v2118, %v2070
      %v2166 = vmul.f32 %v2119, %v2134
      %v2167 = vsub.f32 %v2165, %v2166
      %v2168 = vmul.f32 %v2118, %v2134
      %v2169 = vmul.f32 %v2119, %v2070
      %v2170 = vadd.f32 %v2168, %v2169
      %v2171 = vmul.f32 %v2132, %v2074
      %v2172 = vmul.f32 %v2133, %v2135
      %v2173 = vsub.f32 %v2171, %v2172
      %v2174 = vmul.f32 %v2132, %v2135
      %v2175 = vmul.f32 %v2133, %v2074
      %v2176 = vadd.f32 %v2174, %v2175
      %v2177 = vadd.f32 %v2167, %v2173
      %v2178 = vadd.f32 %v2170, %v2176
      %v2179 = vmul.f32 %v2118, %v2076
      %v2180 = vmul.f32 %v2119, %v2135
      %v2181 = vsub.f32 %v2179, %v2180
      %v2182 = vmul.f32 %v2118, %v2135
      %v2183 = vmul.f32 %v2119, %v2076
      %v2184 = vadd.f32 %v2182, %v2183
      %v2185 = vmul.f32 %v2132, %v2070
      %v2186 = vmul.f32 %v2133, %v2150
      %v2187 = vsub.f32 %v2185, %v2186
      %v2188 = vmul.f32 %v2132, %v2150
      %v2189 = vmul.f32 %v2133, %v2070
      %v2190 = vadd.f32 %v2188, %v2189
      %v2191 = vadd.f32 %v2181, %v2187
      %v2192 = vadd.f32 %v2184, %v2190
      %s2193 = scalar_lea.vmem %s2, %s30
      %2194 = vst [vmem:[%s2193] sm:$0xff] %v2148
      %s2195 = scalar_lea.vmem %s2, %s33
      %2196 = vst [vmem:[%s2195] sm:$0xff] %v2163
      %s2197 = scalar_lea.vmem %s2, %s36
      %2198 = vst [vmem:[%s2197] sm:$0xff] %v2177
      %s2199 = sadd.s32 %s30, 96
      %s2200 = scalar_lea.vmem %s2, %s2199
      %2201 = vst [vmem:[%s2200] sm:$0xff] %v2191
      %s2202 = sadd.s32 %s30, 128
      %s2203 = scalar_lea.vmem %s2, %s2202
      %2204 = vst [vmem:[%s2203] sm:$0xff] %v2149
      %s2205 = sadd.s32 %s30, 160
      %s2206 = scalar_lea.vmem %s2, %s2205
      %2207 = vst [vmem:[%s2206] sm:$0xff] %v2164
      %s2208 = sadd.s32 %s30, 192
      %s2209 = scalar_lea.vmem %s2, %s2208
      %2210 = vst [vmem:[%s2209] sm:$0xff] %v2178
      %s2211 = sadd.s32 %s30, 224
      %s2212 = scalar_lea.vmem %s2, %s2211
      %2213 = vst [vmem:[%s2212] sm:$0xff] %v2192
    $region18: #{classifier_forward.1} parent=1 // loop_footer
      %s29 = sadd.s32 1, %s25
    $region19: #{classifier_forward.1} parent=1 // loop_footer_branch
      %24 = sbr.rel target = $region15
    $region20: #{classifier_forward.1} parent=1 // loop_exit
      _
    // Predicated region
    $region21: #{classifier_forward.1} parent=1 // pred_check
      _
    $region22: #{classifier_forward.1} parent=1 // pred_check_branch
      %2215 = sbr.rel (0) target = $region24
    $region23: #{classifier_forward.1} parent=1 // pred_region
      _
    $region24: #{classifier_forward.1} parent=1 // pred_fallthru
      _
    // Predicated region
    $region25: #{classifier_forward.1} parent=1 // pred_check
      _
    $region26: #{classifier_forward.1} parent=1 // pred_check_branch
      %2217 = sbr.rel (0) target = $region28
    $region27: #{classifier_forward.1} parent=1 // pred_region
      _
    $region28: #{classifier_forward.1} parent=1 // pred_fallthru
      _
    %2218 = vsyncpa [#allocation3], 1

</llo_original>
